<compile_context>
chip_gen: v6e
topology: v6e:2x2x1
jax: 0.10.0
libtpu: 0.0.40
codegen_flags: <defaults>
</compile_context>

<pallas_src>
import jax
import jax.numpy as jnp
import numpy as np
from jax.experimental import pallas as pl
from jax.experimental.pallas import tpu as pltpu


# ---------------------------------------------------------------------------
# Fused kernel factory: (conv3x3 -> BN(train) -> ReLU) x 2 in one pallas_call
# ---------------------------------------------------------------------------
def _make_fused_kernel(N, Hu, Wu, Cin, Cmid, Cout):
    Hp, Wp = Hu + 2, Wu + 2
    M = N * Hu * Wu                      # BN reduction count (N*H*W)
    K1 = Wp * Cin                        # per-ty K chunk, layer 1
    K2 = Wp * Cmid                       # per-ty K chunk, layer 2
    eps = 1e-5

    def group_mats(C, WuC):
        # G  (WuC, C): G[w*C + c, c'] = (c == c')      -> fold w into channel sums
        # GT (C, WuC): GT[c', w*C + c] = (c == c')     -> broadcast channel -> lanes
        rmod = jax.lax.broadcasted_iota(jnp.int32, (WuC, C), 0) % C
        cidx = jax.lax.broadcasted_iota(jnp.int32, (WuC, C), 1)
        G = (rmod == cidx).astype(jnp.float32)
        ridx = jax.lax.broadcasted_iota(jnp.int32, (C, WuC), 0)
        cmod = jax.lax.broadcasted_iota(jnp.int32, (C, WuC), 1) % C
        GT = (ridx == cmod).astype(jnp.float32)
        return G, GT

    def kernel(x1_ref, w1_ref, w2_ref, g1_ref, b1_ref, g2_ref, b2_ref,
               out_ref, lhs1_ref, x2_ref, lhs2_ref):
        # x1_ref   : (N*Hp, Wp*Cin)        bf16  padded unpooled input, (w,c)-packed lanes
        # w1_ref   : (3*Wp*Cin,  Wu*Cmid)  bf16  banded weights, layer 1
        # w2_ref   : (3*Wp*Cmid, Wu*Cout)  bf16  banded weights, layer 2
        # g*/b*    : (1, C)                f32   BN gamma / beta
        # out_ref  : (N*Hu, Wu*Cout)       f32   lane-dense output
        # lhs1_ref : (N*Hu, 3*Wp*Cin)      bf16  scratch (3 ty-shifted copies)
        # x2_ref   : (N*Hp, Wp*Cmid)       bf16  scratch (padded h1)
        # lhs2_ref : (N*Hu, 3*Wp*Cmid)     bf16  scratch

        def bn_relu(y, g_ref, b_ref, C):
            # Training-mode BatchNorm folded into one per-lane scale/shift FMA.
            # Conv bias is omitted: it cancels against the batch mean.
            WuC = Wu * C
            G, GT = group_mats(C, WuC)
            s = jnp.dot(jnp.sum(y, axis=0, keepdims=True), G,
                        preferred_element_type=jnp.float32)          # (1, C)
            q = jnp.dot(jnp.sum(y * y, axis=0, keepdims=True), G,
                        preferred_element_type=jnp.float32)          # (1, C)
            mean = s * (1.0 / M)
            var = q * (1.0 / M) - mean * mean                        # biased variance
            scale = g_ref[...] * jax.lax.rsqrt(var + eps)
            shift = b_ref[...] - mean * scale
            scale_f = jnp.dot(scale, GT, preferred_element_type=jnp.float32)
            shift_f = jnp.dot(shift, GT, preferred_element_type=jnp.float32)
            return jnp.maximum(y * scale_f + shift_f, 0.0)

        # ----- layer 1: conv3x3 (one GEMM) -> BN -> ReLU, stays in VMEM ------
        for n in range(N):                           # static unroll: N*3 block copies
            for ty in range(3):
                lhs1_ref[n * Hu:(n + 1) * Hu, ty * K1:(ty + 1) * K1] = (
                    x1_ref[n * Hp + ty:n * Hp + ty + Hu, :])
        y1 = jnp.dot(lhs1_ref[...], w1_ref[...],
                     preferred_element_type=jnp.float32)             # (N*Hu, Wu*Cmid)
        h1 = bn_relu(y1, g1_ref, b1_ref, Cmid)

        # padded layer-2 activation, channel-packed lanes; borders stay zero
        x2_ref[...] = jnp.zeros(x2_ref.shape, x2_ref.dtype)
        for n in range(N):
            x2_ref[n * Hp + 1:n * Hp + 1 + Hu, Cmid:Cmid + Wu * Cmid] = (
                h1[n * Hu:(n + 1) * Hu, :].astype(x2_ref.dtype))

        # ----- layer 2: conv3x3 (one GEMM) -> BN -> ReLU, into out_ref -------
        for n in range(N):
            for ty in range(3):
                lhs2_ref[n * Hu:(n + 1) * Hu, ty * K2:(ty + 1) * K2] = (
                    x2_ref[n * Hp + ty:n * Hp + ty + Hu, :])
        y2 = jnp.dot(lhs2_ref[...], w2_ref[...],
                     preferred_element_type=jnp.float32)             # (N*Hu, Wu*Cout)
        out_ref[...] = bn_relu(y2, g2_ref, b2_ref, Cout)

    return kernel


# ---------------------------------------------------------------------------
# Plain-JAX glue (tiny data movement / weight prep only)
# ---------------------------------------------------------------------------
def _max_unpool2x(x_nhwc, dy, dx):
    """MaxUnpool2d(2): place each value inside its 2x2 window at (dy, dx)."""
    N, H, W, C = x_nhwc.shape
    z = jnp.zeros_like(x_nhwc)
    m = lambda py, px: jnp.where((dy == py) & (dx == px), x_nhwc, z)
    top = jnp.stack([m(0, 0), m(0, 1)], axis=3).reshape(N, H, 2 * W, C)
    bot = jnp.stack([m(1, 0), m(1, 1)], axis=3).reshape(N, H, 2 * W, C)
    return jnp.stack([top, bot], axis=2).reshape(N, 2 * H, 2 * W, C)


def _banded_weights(w_oihw, Wp, Wu):
    """PyTorch OIHW (O, I, 3, 3) -> banded (3*Wp*I, Wu*O) bf16.

    Row index = ty*(Wp*I) + wp*I + c, column = w*O + o; the horizontal taps
    (tx) are folded into the band structure so the kernel only needs the 3
    vertical (ty) shifted copies of the activation.
    """
    O, I = w_oihw.shape[0], w_oihw.shape[1]
    Wt = jnp.transpose(w_oihw, (2, 3, 1, 0))                 # (ty, tx, I, O)
    wp = jnp.arange(Wp)
    w = jnp.arange(Wu)
    tx = jnp.arange(3)
    sel = (wp[None, :, None] == w[None, None, :] + tx[:, None, None]).astype(
        w_oihw.dtype)                                        # (tx, wp, w)
    big = jnp.einsum("txco,xpw->tpcwo", Wt, sel)             # (3, Wp, I, Wu, O)
    return big.reshape(3 * Wp * I, Wu * O).astype(jnp.bfloat16)


def up_unpool_forward(x_nchw, indices, params):
    """Up_unpool.forward: MaxUnpool2d(2) -> DoubleConv, fused into one kernel."""
    N, Cin, H, W = x_nchw.shape
    Hu, Wu = 2 * H, 2 * W
    Hp, Wp = Hu + 2, Wu + 2
    Cmid = params["w1"].shape[0]
    Cout = params["w2"].shape[0]

    x = jnp.transpose(x_nchw, (0, 2, 3, 1))              # NCHW -> NHWC
    idx = jnp.transpose(indices, (0, 2, 3, 1))
    dy = ((idx // Wu) % 2).astype(jnp.int32)             # offsets inside 2x2 win
    dx = (idx % 2).astype(jnp.int32)
    up = _max_unpool2x(x, dy, dx)                        # (N, Hu, Wu, Cin)
    up_pad = jnp.pad(up, ((0, 0), (1, 1), (1, 1), (0, 0)))
    x1 = up_pad.reshape(N * Hp, Wp * Cin).astype(jnp.bfloat16)

    w1b = _banded_weights(params["w1"], Wp, Wu)          # (3*Wp*Cin,  Wu*Cmid)
    w2b = _banded_weights(params["w2"], Wp, Wu)          # (3*Wp*Cmid, Wu*Cout)
    # Conv biases b1/b2 are intentionally NOT passed to the kernel: a constant
    # per-channel offset cancels exactly under training-mode BatchNorm.
    g1 = params["g1"].reshape(1, Cmid).astype(jnp.float32)
    be1 = params["be1"].reshape(1, Cmid).astype(jnp.float32)
    g2 = params["g2"].reshape(1, Cout).astype(jnp.float32)
    be2 = params["be2"].reshape(1, Cout).astype(jnp.float32)

    kernel = _make_fused_kernel(N, Hu, Wu, Cin, Cmid, Cout)
    out2d = pl.pallas_call(
        kernel,
        out_shape=jax.ShapeDtypeStruct((N * Hu, Wu * Cout), jnp.float32),
        scratch_shapes=[
            pltpu.VMEM((N * Hu, 3 * Wp * Cin), jnp.bfloat16),   # LHS, layer 1
            pltpu.VMEM((N * Hp, Wp * Cmid), jnp.bfloat16),      # padded h1
            pltpu.VMEM((N * Hu, 3 * Wp * Cmid), jnp.bfloat16),  # LHS, layer 2
        ],
    )(x1, w1b, w2b, g1, be1, g2, be2)

    out = out2d.reshape(N, Hu, Wu, Cout)
    return jnp.transpose(out, (0, 3, 1, 2))              # back to NCHW


# ---------------------------------------------------------------------------
# Pure-JAX f32 reference (NCHW, lax.conv, with conv biases) for a sanity check
# ---------------------------------------------------------------------------
def ref_forward(x_nchw, indices, p):
    N, C, H, W = x_nchw.shape
    Ho, Wo = 2 * H, 2 * W
    dy = (indices // Wo) % 2
    dx = indices % 2
    n_i = jnp.arange(N)[:, None, None, None]
    c_i = jnp.arange(C)[None, :, None, None]
    rows = 2 * jnp.arange(H)[None, None, :, None] + dy
    cols = 2 * jnp.arange(W)[None, None, None, :] + dx
    up = jnp.zeros((N, C, Ho, Wo), x_nchw.dtype).at[n_i, c_i, rows, cols].set(x_nchw)

    def block(x, w, b, g, be):
        y = jax.lax.conv_general_dilated(
            x, w, (1, 1), "SAME", dimension_numbers=("NCHW", "OIHW", "NCHW")
        ) + b[None, :, None, None]
        mean = y.mean(axis=(0, 2, 3), keepdims=True)
        var = ((y - mean) ** 2).mean(axis=(0, 2, 3), keepdims=True)
        y = (y - mean) * (g[None, :, None, None] / jnp.sqrt(var + 1e-5)) + be[None, :, None, None]
        return jnp.maximum(y, 0.0)

    h = block(up, p["w1"], p["b1"], p["g1"], p["be1"])
    return block(h, p["w2"], p["b2"], p["g2"], p["be2"])


# ---------------------------------------------------------------------------
if __name__ == "__main__":
    key = jax.random.PRNGKey(0)
    kx, ki, k1, k2, k3, k4, k5, k6, k7, k8 = jax.random.split(key, 10)

    in_channels, out_channels = 16, 8       # Up_unpool(16, 8)
    Cin = in_channels // 4                  # conv input channels = 4
    Cmid = out_channels                     # DoubleConv mid = out
    Cout = out_channels
    N, H, W = 2, 8, 8                       # unpool -> 16x16

    x = jax.random.normal(kx, (N, Cin, H, W), jnp.float32)

    # Deterministic unpool indices (flat index into the (2H, 2W) output plane),
    # one argmax position per 2x2 window — what MaxPool2d(return_indices=True)
    # would have produced.
    off = jax.random.randint(ki, (N, Cin, H, W), 0, 4)
    hh = jnp.arange(H)[None, None, :, None]
    ww = jnp.arange(W)[None, None, None, :]
    indices = (2 * hh + off // 2) * (2 * W) + (2 * ww + off % 2)

    params = dict(
        w1=0.2 * jax.random.normal(k1, (Cmid, Cin, 3, 3), jnp.float32),
        b1=0.1 * jax.random.normal(k2, (Cmid,), jnp.float32),
        g1=1.0 + 0.1 * jax.random.normal(k3, (Cmid,), jnp.float32),
        be1=0.1 * jax.random.normal(k4, (Cmid,), jnp.float32),
        w2=0.2 * jax.random.normal(k5, (Cout, Cmid, 3, 3), jnp.float32),
        b2=0.1 * jax.random.normal(k6, (Cout,), jnp.float32),
        g2=1.0 + 0.1 * jax.random.normal(k7, (Cout,), jnp.float32),
        be2=0.1 * jax.random.normal(k8, (Cout,), jnp.float32),
    )

    fwd = jax.jit(up_unpool_forward)
    out = jax.block_until_ready(fwd(x, indices, params))
    assert out.shape == (N, out_channels, 2 * H, 2 * W)

    ref = ref_forward(x, indices, params)
    np.testing.assert_allclose(np.asarray(out), np.asarray(ref), rtol=3e-2, atol=3e-2)

    print("KERNEL_OK")
</pallas_src>

<mosaic_0001>
module attributes {stable_mosaic.version = 11 : i64} {
  func.func @kernel(%arg0: memref<36x72xbf16, #tpu.memory_space<vmem>>, %arg1: memref<216x128xbf16, #tpu.memory_space<vmem>>, %arg2: memref<432x128xbf16, #tpu.memory_space<vmem>>, %arg3: memref<1x8xf32, #tpu.memory_space<vmem>>, %arg4: memref<1x8xf32, #tpu.memory_space<vmem>>, %arg5: memref<1x8xf32, #tpu.memory_space<vmem>>, %arg6: memref<1x8xf32, #tpu.memory_space<vmem>>, %arg7: memref<32x128xf32, #tpu.memory_space<vmem>>, %arg8: memref<32x216xbf16, #tpu.memory_space<vmem>>, %arg9: memref<36x144xbf16, #tpu.memory_space<vmem>>, %arg10: memref<32x432xbf16, #tpu.memory_space<vmem>>) attributes {dimension_semantics = [], scalar_prefetch = 0 : i64, scratch_operands = 3 : i64, tpu.core_type = #tpu.core_type<tc>} {
    %c0 = arith.constant 0 : index
    %c0_0 = arith.constant 0 : index
    %0 = vector.load %arg0[%c0, %c0_0] : memref<36x72xbf16, #tpu.memory_space<vmem>>, vector<16x72xbf16>
    %c0_1 = arith.constant 0 : index
    %c0_2 = arith.constant 0 : index
    %1 = vector.load %arg8[%c0_1, %c0_2] : memref<32x216xbf16, #tpu.memory_space<vmem>>, vector<16x72xbf16>
    tpu.vector_store %arg8[%c0_1, %c0_2], %0 {strides = array<i32>} : memref<32x216xbf16, #tpu.memory_space<vmem>>, vector<16x72xbf16>,
    %c1 = arith.constant 1 : index
    %c0_3 = arith.constant 0 : index
    %2 = vector.load %arg0[%c1, %c0_3] : memref<36x72xbf16, #tpu.memory_space<vmem>>, vector<16x72xbf16>
    %c0_4 = arith.constant 0 : index
    %c72 = arith.constant 72 : index
    %3 = vector.load %arg8[%c0_4, %c72] : memref<32x216xbf16, #tpu.memory_space<vmem>>, vector<16x72xbf16>
    tpu.vector_store %arg8[%c0_4, %c72], %2 {strides = array<i32>} : memref<32x216xbf16, #tpu.memory_space<vmem>>, vector<16x72xbf16>,
    %c2 = arith.constant 2 : index
    %c0_5 = arith.constant 0 : index
    %4 = vector.load %arg0[%c2, %c0_5] : memref<36x72xbf16, #tpu.memory_space<vmem>>, vector<16x72xbf16>
    %c0_6 = arith.constant 0 : index
    %c144 = arith.constant 144 : index
    %5 = vector.load %arg8[%c0_6, %c144] : memref<32x216xbf16, #tpu.memory_space<vmem>>, vector<16x72xbf16>
    tpu.vector_store %arg8[%c0_6, %c144], %4 {strides = array<i32>} : memref<32x216xbf16, #tpu.memory_space<vmem>>, vector<16x72xbf16>,
    %c18 = arith.constant 18 : index
    %c0_7 = arith.constant 0 : index
    %6 = vector.load %arg0[%c18, %c0_7] : memref<36x72xbf16, #tpu.memory_space<vmem>>, vector<16x72xbf16>
    %c16 = arith.constant 16 : index
    %c0_8 = arith.constant 0 : index
    %7 = vector.load %arg8[%c16, %c0_8] : memref<32x216xbf16, #tpu.memory_space<vmem>>, vector<16x72xbf16>
    tpu.vector_store %arg8[%c16, %c0_8], %6 {strides = array<i32>} : memref<32x216xbf16, #tpu.memory_space<vmem>>, vector<16x72xbf16>,
    %c19 = arith.constant 19 : index
    %c0_9 = arith.constant 0 : index
    %8 = vector.load %arg0[%c19, %c0_9] : memref<36x72xbf16, #tpu.memory_space<vmem>>, vector<16x72xbf16>
    %c16_10 = arith.constant 16 : index
    %c72_11 = arith.constant 72 : index
    %9 = vector.load %arg8[%c16_10, %c72_11] : memref<32x216xbf16, #tpu.memory_space<vmem>>, vector<16x72xbf16>
    tpu.vector_store %arg8[%c16_10, %c72_11], %8 {strides = array<i32>} : memref<32x216xbf16, #tpu.memory_space<vmem>>, vector<16x72xbf16>,
    %c20 = arith.constant 20 : index
    %c0_12 = arith.constant 0 : index
    %10 = vector.load %arg0[%c20, %c0_12] : memref<36x72xbf16, #tpu.memory_space<vmem>>, vector<16x72xbf16>
    %c16_13 = arith.constant 16 : index
    %c144_14 = arith.constant 144 : index
    %11 = vector.load %arg8[%c16_13, %c144_14] : memref<32x216xbf16, #tpu.memory_space<vmem>>, vector<16x72xbf16>
    tpu.vector_store %arg8[%c16_13, %c144_14], %10 {strides = array<i32>} : memref<32x216xbf16, #tpu.memory_space<vmem>>, vector<16x72xbf16>,
    %c0_15 = arith.constant 0 : index
    %c0_16 = arith.constant 0 : index
    %12 = vector.load %arg8[%c0_15, %c0_16] : memref<32x216xbf16, #tpu.memory_space<vmem>>, vector<32x216xbf16>
    %c0_17 = arith.constant 0 : index
    %c0_18 = arith.constant 0 : index
    %13 = vector.load %arg1[%c0_17, %c0_18] : memref<216x128xbf16, #tpu.memory_space<vmem>>, vector<216x128xbf16>
    %cst = arith.constant dense<0.000000e+00> : vector<32x128xf32>
    %14 = tpu.matmul %12, %13, %cst {dimension_numbers = #tpu.dot_dimension_numbers<[1], [0], [0], [1], [0, 0, 1, 1], [], []>} : vector<32x216xbf16>, vector<216x128xbf16>, vector<32x128xf32> -> vector<32x128xf32>
    %15 = tpu.iota {dimensions = array<i32: 0>} : vector<128x8xi32>
    %c8_i32 = arith.constant 8 : i32
    %c0_i32 = arith.constant 0 : i32
    %16 = arith.cmpi eq, %c8_i32, %c0_i32 : i32
    %c1_i32 = arith.constant 1 : i32
    %17 = arith.select %16, %c1_i32, %c8_i32 : i32
    %18 = vector.broadcast %17 : i32 to vector<128x8xi32>
    %19 = arith.remsi %15, %18 : vector<128x8xi32>
    %c0_i32_19 = arith.constant 0 : i32
    %20 = vector.broadcast %c0_i32_19 : i32 to vector<128x8xi32>
    %21 = arith.cmpi ne, %19, %20 : vector<128x8xi32>
    %c0_i32_20 = arith.constant 0 : i32
    %22 = vector.broadcast %c0_i32_20 : i32 to vector<128x8xi32>
    %23 = arith.cmpi slt, %19, %22 : vector<128x8xi32>
    %c0_i32_21 = arith.constant 0 : i32
    %24 = arith.cmpi slt, %17, %c0_i32_21 : i32
    %25 = vector.broadcast %24 : i1 to vector<128x8xi1>
    %26 = vector.broadcast %25 : vector<128x8xi1> to vector<128x8xi1>
    %27 = arith.xori %23, %26 : vector<128x8xi1>
    %28 = arith.andi %27, %21 : vector<128x8xi1>
    %29 = vector.broadcast %17 : i32 to vector<128x8xi32>
    %30 = arith.addi %19, %29 : vector<128x8xi32>
    %31 = arith.select %28, %30, %19 : vector<128x8xi1>, vector<128x8xi32>
    %32 = tpu.iota {dimensions = array<i32: 1>} : vector<128x8xi32>
    %33 = arith.cmpi eq, %31, %32 : vector<128x8xi32>
    %34 = arith.extui %33 : vector<128x8xi1> to vector<128x8xi32>
    %35 = arith.sitofp %34 : vector<128x8xi32> to vector<128x8xf32>
    %36 = tpu.iota {dimensions = array<i32: 0>} : vector<8x128xi32>
    %37 = tpu.iota {dimensions = array<i32: 1>} : vector<8x128xi32>
    %c8_i32_22 = arith.constant 8 : i32
    %c0_i32_23 = arith.constant 0 : i32
    %38 = arith.cmpi eq, %c8_i32_22, %c0_i32_23 : i32
    %c1_i32_24 = arith.constant 1 : i32
    %39 = arith.select %38, %c1_i32_24, %c8_i32_22 : i32
    %40 = vector.broadcast %39 : i32 to vector<8x128xi32>
    %41 = arith.remsi %37, %40 : vector<8x128xi32>
    %c0_i32_25 = arith.constant 0 : i32
    %42 = vector.broadcast %c0_i32_25 : i32 to vector<8x128xi32>
    %43 = arith.cmpi ne, %41, %42 : vector<8x128xi32>
    %c0_i32_26 = arith.constant 0 : i32
    %44 = vector.broadcast %c0_i32_26 : i32 to vector<8x128xi32>
    %45 = arith.cmpi slt, %41, %44 : vector<8x128xi32>
    %c0_i32_27 = arith.constant 0 : i32
    %46 = arith.cmpi slt, %39, %c0_i32_27 : i32
    %47 = vector.broadcast %46 : i1 to vector<8x128xi1>
    %48 = vector.broadcast %47 : vector<8x128xi1> to vector<8x128xi1>
    %49 = arith.xori %45, %48 : vector<8x128xi1>
    %50 = arith.andi %49, %43 : vector<8x128xi1>
    %51 = vector.broadcast %39 : i32 to vector<8x128xi32>
    %52 = arith.addi %41, %51 : vector<8x128xi32>
    %53 = arith.select %50, %52, %41 : vector<8x128xi1>, vector<8x128xi32>
    %54 = arith.cmpi eq, %36, %53 : vector<8x128xi32>
    %55 = arith.extui %54 : vector<8x128xi1> to vector<8x128xi32>
    %56 = arith.sitofp %55 : vector<8x128xi32> to vector<8x128xf32>
    %cst_28 = arith.constant dense<0.000000e+00> : vector<128xf32>
    %57 = vector.multi_reduction <add>, %14, %cst_28 [0] : vector<32x128xf32> to vector<128xf32>
    %58 = vector.shape_cast %57 : vector<128xf32> to vector<1x128xf32>
    %cst_29 = arith.constant dense<0.000000e+00> : vector<1x8xf32>
    %59 = tpu.matmul %58, %35, %cst_29 {dimension_numbers = #tpu.dot_dimension_numbers<[1], [0], [0], [1], [0, 0, 1, 1], [], []>} : vector<1x128xf32>, vector<128x8xf32>, vector<1x8xf32> -> vector<1x8xf32>
    %60 = arith.mulf %14, %14 : vector<32x128xf32>
    %cst_30 = arith.constant dense<0.000000e+00> : vector<128xf32>
    %61 = vector.multi_reduction <add>, %60, %cst_30 [0] : vector<32x128xf32> to vector<128xf32>
    %62 = vector.shape_cast %61 : vector<128xf32> to vector<1x128xf32>
    %cst_31 = arith.constant dense<0.000000e+00> : vector<1x8xf32>
    %63 = tpu.matmul %62, %35, %cst_31 {dimension_numbers = #tpu.dot_dimension_numbers<[1], [0], [0], [1], [0, 0, 1, 1], [], []>} : vector<1x128xf32>, vector<128x8xf32>, vector<1x8xf32> -> vector<1x8xf32>
    %cst_32 = arith.constant 0.001953125 : f32
    %64 = vector.broadcast %cst_32 : f32 to vector<1x8xf32>
    %65 = arith.mulf %59, %64 : vector<1x8xf32>
    %cst_33 = arith.constant 0.001953125 : f32
    %66 = vector.broadcast %cst_33 : f32 to vector<1x8xf32>
    %67 = arith.mulf %63, %66 : vector<1x8xf32>
    %68 = arith.mulf %65, %65 : vector<1x8xf32>
    %69 = arith.subf %67, %68 : vector<1x8xf32>
    %c0_34 = arith.constant 0 : index
    %c0_35 = arith.constant 0 : index
    %70 = vector.load %arg3[%c0_34, %c0_35] : memref<1x8xf32, #tpu.memory_space<vmem>>, vector<1x8xf32>
    %cst_36 = arith.constant 9.99999974E-6 : f32
    %71 = vector.broadcast %cst_36 : f32 to vector<1x8xf32>
    %72 = arith.addf %69, %71 : vector<1x8xf32>
    %73 = math.rsqrt %72 : vector<1x8xf32>
    %74 = arith.mulf %70, %73 : vector<1x8xf32>
    %c0_37 = arith.constant 0 : index
    %c0_38 = arith.constant 0 : index
    %75 = vector.load %arg4[%c0_37, %c0_38] : memref<1x8xf32, #tpu.memory_space<vmem>>, vector<1x8xf32>
    %76 = arith.mulf %65, %74 : vector<1x8xf32>
    %77 = arith.subf %75, %76 : vector<1x8xf32>
    %cst_39 = arith.constant dense<0.000000e+00> : vector<1x128xf32>
    %78 = tpu.matmul %74, %56, %cst_39 {dimension_numbers = #tpu.dot_dimension_numbers<[1], [0], [0], [1], [0, 0, 1, 1], [], []>} : vector<1x8xf32>, vector<8x128xf32>, vector<1x128xf32> -> vector<1x128xf32>
    %cst_40 = arith.constant dense<0.000000e+00> : vector<1x128xf32>
    %79 = tpu.matmul %77, %56, %cst_40 {dimension_numbers = #tpu.dot_dimension_numbers<[1], [0], [0], [1], [0, 0, 1, 1], [], []>} : vector<1x8xf32>, vector<8x128xf32>, vector<1x128xf32> -> vector<1x128xf32>
    %80 = vector.broadcast %78 : vector<1x128xf32> to vector<32x128xf32>
    %81 = arith.mulf %14, %80 : vector<32x128xf32>
    %82 = vector.broadcast %79 : vector<1x128xf32> to vector<32x128xf32>
    %83 = arith.addf %81, %82 : vector<32x128xf32>
    %cst_41 = arith.constant 0.000000e+00 : f32
    %84 = vector.broadcast %cst_41 : f32 to vector<32x128xf32>
    %85 = arith.maximumf %83, %84 : vector<32x128xf32>
    %cst_42 = arith.constant 0.000000e+00 : bf16
    %86 = vector.broadcast %cst_42 : bf16 to vector<36x144xbf16>
    %c0_43 = arith.constant 0 : index
    %c0_44 = arith.constant 0 : index
    %87 = vector.load %arg9[%c0_43, %c0_44] : memref<36x144xbf16, #tpu.memory_space<vmem>>, vector<36x144xbf16>
    tpu.vector_store %arg9[%c0_43, %c0_44], %86 {strides = array<i32>} : memref<36x144xbf16, #tpu.memory_space<vmem>>, vector<36x144xbf16>,
    %88 = vector.extract_strided_slice %85 {offsets = [0, 0], sizes = [16, 128], strides = [1, 1]} : vector<32x128xf32> to vector<16x128xf32>
    %89 = arith.truncf %88 : vector<16x128xf32> to vector<16x128xbf16>
    %c1_45 = arith.constant 1 : index
    %c8 = arith.constant 8 : index
    %90 = vector.load %arg9[%c1_45, %c8] : memref<36x144xbf16, #tpu.memory_space<vmem>>, vector<16x128xbf16>
    tpu.vector_store %arg9[%c1_45, %c8], %89 {strides = array<i32>} : memref<36x144xbf16, #tpu.memory_space<vmem>>, vector<16x128xbf16>,
    %91 = vector.extract_strided_slice %85 {offsets = [16, 0], sizes = [16, 128], strides = [1, 1]} : vector<32x128xf32> to vector<16x128xf32>
    %92 = arith.truncf %91 : vector<16x128xf32> to vector<16x128xbf16>
    %c19_46 = arith.constant 19 : index
    %c8_47 = arith.constant 8 : index
    %93 = vector.load %arg9[%c19_46, %c8_47] : memref<36x144xbf16, #tpu.memory_space<vmem>>, vector<16x128xbf16>
    tpu.vector_store %arg9[%c19_46, %c8_47], %92 {strides = array<i32>} : memref<36x144xbf16, #tpu.memory_space<vmem>>, vector<16x128xbf16>,
    %c0_48 = arith.constant 0 : index
    %c0_49 = arith.constant 0 : index
    %94 = vector.load %arg9[%c0_48, %c0_49] : memref<36x144xbf16, #tpu.memory_space<vmem>>, vector<16x144xbf16>
    %c0_50 = arith.constant 0 : index
    %c0_51 = arith.constant 0 : index
    %95 = vector.load %arg10[%c0_50, %c0_51] : memref<32x432xbf16, #tpu.memory_space<vmem>>, vector<16x144xbf16>
    tpu.vector_store %arg10[%c0_50, %c0_51], %94 {strides = array<i32>} : memref<32x432xbf16, #tpu.memory_space<vmem>>, vector<16x144xbf16>,
    %c1_52 = arith.constant 1 : index
    %c0_53 = arith.constant 0 : index
    %96 = vector.load %arg9[%c1_52, %c0_53] : memref<36x144xbf16, #tpu.memory_space<vmem>>, vector<16x144xbf16>
    %c0_54 = arith.constant 0 : index
    %c144_55 = arith.constant 144 : index
    %97 = vector.load %arg10[%c0_54, %c144_55] : memref<32x432xbf16, #tpu.memory_space<vmem>>, vector<16x144xbf16>
    tpu.vector_store %arg10[%c0_54, %c144_55], %96 {strides = array<i32>} : memref<32x432xbf16, #tpu.memory_space<vmem>>, vector<16x144xbf16>,
    %c2_56 = arith.constant 2 : index
    %c0_57 = arith.constant 0 : index
    %98 = vector.load %arg9[%c2_56, %c0_57] : memref<36x144xbf16, #tpu.memory_space<vmem>>, vector<16x144xbf16>
    %c0_58 = arith.constant 0 : index
    %c288 = arith.constant 288 : index
    %99 = vector.load %arg10[%c0_58, %c288] : memref<32x432xbf16, #tpu.memory_space<vmem>>, vector<16x144xbf16>
    tpu.vector_store %arg10[%c0_58, %c288], %98 {strides = array<i32>} : memref<32x432xbf16, #tpu.memory_space<vmem>>, vector<16x144xbf16>,
    %c18_59 = arith.constant 18 : index
    %c0_60 = arith.constant 0 : index
    %100 = vector.load %arg9[%c18_59, %c0_60] : memref<36x144xbf16, #tpu.memory_space<vmem>>, vector<16x144xbf16>
    %c16_61 = arith.constant 16 : index
    %c0_62 = arith.constant 0 : index
    %101 = vector.load %arg10[%c16_61, %c0_62] : memref<32x432xbf16, #tpu.memory_space<vmem>>, vector<16x144xbf16>
    tpu.vector_store %arg10[%c16_61, %c0_62], %100 {strides = array<i32>} : memref<32x432xbf16, #tpu.memory_space<vmem>>, vector<16x144xbf16>,
    %c19_63 = arith.constant 19 : index
    %c0_64 = arith.constant 0 : index
    %102 = vector.load %arg9[%c19_63, %c0_64] : memref<36x144xbf16, #tpu.memory_space<vmem>>, vector<16x144xbf16>
    %c16_65 = arith.constant 16 : index
    %c144_66 = arith.constant 144 : index
    %103 = vector.load %arg10[%c16_65, %c144_66] : memref<32x432xbf16, #tpu.memory_space<vmem>>, vector<16x144xbf16>
    tpu.vector_store %arg10[%c16_65, %c144_66], %102 {strides = array<i32>} : memref<32x432xbf16, #tpu.memory_space<vmem>>, vector<16x144xbf16>,
    %c20_67 = arith.constant 20 : index
    %c0_68 = arith.constant 0 : index
    %104 = vector.load %arg9[%c20_67, %c0_68] : memref<36x144xbf16, #tpu.memory_space<vmem>>, vector<16x144xbf16>
    %c16_69 = arith.constant 16 : index
    %c288_70 = arith.constant 288 : index
    %105 = vector.load %arg10[%c16_69, %c288_70] : memref<32x432xbf16, #tpu.memory_space<vmem>>, vector<16x144xbf16>
    tpu.vector_store %arg10[%c16_69, %c288_70], %104 {strides = array<i32>} : memref<32x432xbf16, #tpu.memory_space<vmem>>, vector<16x144xbf16>,
    %c0_71 = arith.constant 0 : index
    %c0_72 = arith.constant 0 : index
    %106 = vector.load %arg10[%c0_71, %c0_72] : memref<32x432xbf16, #tpu.memory_space<vmem>>, vector<32x432xbf16>
    %c0_73 = arith.constant 0 : index
    %c0_74 = arith.constant 0 : index
    %107 = vector.load %arg2[%c0_73, %c0_74] : memref<432x128xbf16, #tpu.memory_space<vmem>>, vector<432x128xbf16>
    %cst_75 = arith.constant dense<0.000000e+00> : vector<32x128xf32>
    %108 = tpu.matmul %106, %107, %cst_75 {dimension_numbers = #tpu.dot_dimension_numbers<[1], [0], [0], [1], [0, 0, 1, 1], [], []>} : vector<32x432xbf16>, vector<432x128xbf16>, vector<32x128xf32> -> vector<32x128xf32>
    %109 = tpu.iota {dimensions = array<i32: 0>} : vector<128x8xi32>
    %c8_i32_76 = arith.constant 8 : i32
    %c0_i32_77 = arith.constant 0 : i32
    %110 = arith.cmpi eq, %c8_i32_76, %c0_i32_77 : i32
    %c1_i32_78 = arith.constant 1 : i32
    %111 = arith.select %110, %c1_i32_78, %c8_i32_76 : i32
    %112 = vector.broadcast %111 : i32 to vector<128x8xi32>
    %113 = arith.remsi %109, %112 : vector<128x8xi32>
    %c0_i32_79 = arith.constant 0 : i32
    %114 = vector.broadcast %c0_i32_79 : i32 to vector<128x8xi32>
    %115 = arith.cmpi ne, %113, %114 : vector<128x8xi32>
    %c0_i32_80 = arith.constant 0 : i32
    %116 = vector.broadcast %c0_i32_80 : i32 to vector<128x8xi32>
    %117 = arith.cmpi slt, %113, %116 : vector<128x8xi32>
    %c0_i32_81 = arith.constant 0 : i32
    %118 = arith.cmpi slt, %111, %c0_i32_81 : i32
    %119 = vector.broadcast %118 : i1 to vector<128x8xi1>
    %120 = vector.broadcast %119 : vector<128x8xi1> to vector<128x8xi1>
    %121 = arith.xori %117, %120 : vector<128x8xi1>
    %122 = arith.andi %121, %115 : vector<128x8xi1>
    %123 = vector.broadcast %111 : i32 to vector<128x8xi32>
    %124 = arith.addi %113, %123 : vector<128x8xi32>
    %125 = arith.select %122, %124, %113 : vector<128x8xi1>, vector<128x8xi32>
    %126 = tpu.iota {dimensions = array<i32: 1>} : vector<128x8xi32>
    %127 = arith.cmpi eq, %125, %126 : vector<128x8xi32>
    %128 = arith.extui %127 : vector<128x8xi1> to vector<128x8xi32>
    %129 = arith.sitofp %128 : vector<128x8xi32> to vector<128x8xf32>
    %130 = tpu.iota {dimensions = array<i32: 0>} : vector<8x128xi32>
    %131 = tpu.iota {dimensions = array<i32: 1>} : vector<8x128xi32>
    %c8_i32_82 = arith.constant 8 : i32
    %c0_i32_83 = arith.constant 0 : i32
    %132 = arith.cmpi eq, %c8_i32_82, %c0_i32_83 : i32
    %c1_i32_84 = arith.constant 1 : i32
    %133 = arith.select %132, %c1_i32_84, %c8_i32_82 : i32
    %134 = vector.broadcast %133 : i32 to vector<8x128xi32>
    %135 = arith.remsi %131, %134 : vector<8x128xi32>
    %c0_i32_85 = arith.constant 0 : i32
    %136 = vector.broadcast %c0_i32_85 : i32 to vector<8x128xi32>
    %137 = arith.cmpi ne, %135, %136 : vector<8x128xi32>
    %c0_i32_86 = arith.constant 0 : i32
    %138 = vector.broadcast %c0_i32_86 : i32 to vector<8x128xi32>
    %139 = arith.cmpi slt, %135, %138 : vector<8x128xi32>
    %c0_i32_87 = arith.constant 0 : i32
    %140 = arith.cmpi slt, %133, %c0_i32_87 : i32
    %141 = vector.broadcast %140 : i1 to vector<8x128xi1>
    %142 = vector.broadcast %141 : vector<8x128xi1> to vector<8x128xi1>
    %143 = arith.xori %139, %142 : vector<8x128xi1>
    %144 = arith.andi %143, %137 : vector<8x128xi1>
    %145 = vector.broadcast %133 : i32 to vector<8x128xi32>
    %146 = arith.addi %135, %145 : vector<8x128xi32>
    %147 = arith.select %144, %146, %135 : vector<8x128xi1>, vector<8x128xi32>
    %148 = arith.cmpi eq, %130, %147 : vector<8x128xi32>
    %149 = arith.extui %148 : vector<8x128xi1> to vector<8x128xi32>
    %150 = arith.sitofp %149 : vector<8x128xi32> to vector<8x128xf32>
    %cst_88 = arith.constant dense<0.000000e+00> : vector<128xf32>
    %151 = vector.multi_reduction <add>, %108, %cst_88 [0] : vector<32x128xf32> to vector<128xf32>
    %152 = vector.shape_cast %151 : vector<128xf32> to vector<1x128xf32>
    %cst_89 = arith.constant dense<0.000000e+00> : vector<1x8xf32>
    %153 = tpu.matmul %152, %129, %cst_89 {dimension_numbers = #tpu.dot_dimension_numbers<[1], [0], [0], [1], [0, 0, 1, 1], [], []>} : vector<1x128xf32>, vector<128x8xf32>, vector<1x8xf32> -> vector<1x8xf32>
    %154 = arith.mulf %108, %108 : vector<32x128xf32>
    %cst_90 = arith.constant dense<0.000000e+00> : vector<128xf32>
    %155 = vector.multi_reduction <add>, %154, %cst_90 [0] : vector<32x128xf32> to vector<128xf32>
    %156 = vector.shape_cast %155 : vector<128xf32> to vector<1x128xf32>
    %cst_91 = arith.constant dense<0.000000e+00> : vector<1x8xf32>
    %157 = tpu.matmul %156, %129, %cst_91 {dimension_numbers = #tpu.dot_dimension_numbers<[1], [0], [0], [1], [0, 0, 1, 1], [], []>} : vector<1x128xf32>, vector<128x8xf32>, vector<1x8xf32> -> vector<1x8xf32>
    %cst_92 = arith.constant 0.001953125 : f32
    %158 = vector.broadcast %cst_92 : f32 to vector<1x8xf32>
    %159 = arith.mulf %153, %158 : vector<1x8xf32>
    %cst_93 = arith.constant 0.001953125 : f32
    %160 = vector.broadcast %cst_93 : f32 to vector<1x8xf32>
    %161 = arith.mulf %157, %160 : vector<1x8xf32>
    %162 = arith.mulf %159, %159 : vector<1x8xf32>
    %163 = arith.subf %161, %162 : vector<1x8xf32>
    %c0_94 = arith.constant 0 : index
    %c0_95 = arith.constant 0 : index
    %164 = vector.load %arg5[%c0_94, %c0_95] : memref<1x8xf32, #tpu.memory_space<vmem>>, vector<1x8xf32>
    %cst_96 = arith.constant 9.99999974E-6 : f32
    %165 = vector.broadcast %cst_96 : f32 to vector<1x8xf32>
    %166 = arith.addf %163, %165 : vector<1x8xf32>
    %167 = math.rsqrt %166 : vector<1x8xf32>
    %168 = arith.mulf %164, %167 : vector<1x8xf32>
    %c0_97 = arith.constant 0 : index
    %c0_98 = arith.constant 0 : index
    %169 = vector.load %arg6[%c0_97, %c0_98] : memref<1x8xf32, #tpu.memory_space<vmem>>, vector<1x8xf32>
    %170 = arith.mulf %159, %168 : vector<1x8xf32>
    %171 = arith.subf %169, %170 : vector<1x8xf32>
    %cst_99 = arith.constant dense<0.000000e+00> : vector<1x128xf32>
    %172 = tpu.matmul %168, %150, %cst_99 {dimension_numbers = #tpu.dot_dimension_numbers<[1], [0], [0], [1], [0, 0, 1, 1], [], []>} : vector<1x8xf32>, vector<8x128xf32>, vector<1x128xf32> -> vector<1x128xf32>
    %cst_100 = arith.constant dense<0.000000e+00> : vector<1x128xf32>
    %173 = tpu.matmul %171, %150, %cst_100 {dimension_numbers = #tpu.dot_dimension_numbers<[1], [0], [0], [1], [0, 0, 1, 1], [], []>} : vector<1x8xf32>, vector<8x128xf32>, vector<1x128xf32> -> vector<1x128xf32>
    %174 = vector.broadcast %172 : vector<1x128xf32> to vector<32x128xf32>
    %175 = arith.mulf %108, %174 : vector<32x128xf32>
    %176 = vector.broadcast %173 : vector<1x128xf32> to vector<32x128xf32>
    %177 = arith.addf %175, %176 : vector<32x128xf32>
    %cst_101 = arith.constant 0.000000e+00 : f32
    %178 = vector.broadcast %cst_101 : f32 to vector<32x128xf32>
    %179 = arith.maximumf %177, %178 : vector<32x128xf32>
    %c0_102 = arith.constant 0 : index
    %c0_103 = arith.constant 0 : index
    %180 = vector.load %arg7[%c0_102, %c0_103] : memref<32x128xf32, #tpu.memory_space<vmem>>, vector<32x128xf32>
    tpu.vector_store %arg7[%c0_102, %c0_103], %179 {strides = array<i32>} : memref<32x128xf32, #tpu.memory_space<vmem>>, vector<32x128xf32>,
    return
  }
}

</mosaic_0001>

<llo_original>
// kernel: up_unpool_forward.1
$region0: #{up_unpool_forward.1}
  #allocation0 [shape = 'u32[]', space=smem, size = 0x4, offset = 0x4, fixed_abs, tag = 'smem constant byte address 0x4 - core index']
  #allocation1 [shape = 'u32[144,128]{1,0:T(1,128)}', space=vmem, size = 0x12000, scoped, tag = 'internal scratch']
  #allocation2 [shape = 'bf16[32,216]{1,0:T(8,128)(2,1)}', space=vmem, size = 0x4000, scoped, tag = 'scratch operand']
  #allocation3 [shape = 'bf16[36,144]{1,0:T(8,128)(2,1)}', space=vmem, size = 0x5000, scoped, tag = 'scratch operand']
  #allocation4 [shape = 'bf16[32,432]{1,0:T(8,128)(2,1)}', space=vmem, size = 0x8000, scoped, tag = 'scratch operand']
  %s0 = inlined_call_operand.vmem [shape: bf16[36,72], index: 0, kind: input, shape index: {}]
  %s1 = inlined_call_operand.vmem [shape: bf16[216,128], index: 1, kind: input, shape index: {}]
  %s2 = inlined_call_operand.vmem [shape: bf16[432,128], index: 2, kind: input, shape index: {}]
  %s3 = inlined_call_operand.vmem [shape: f32[1,8], index: 3, kind: input, shape index: {}]
  %s4 = inlined_call_operand.vmem [shape: f32[1,8], index: 4, kind: input, shape index: {}]
  %s5 = inlined_call_operand.vmem [shape: f32[1,8], index: 5, kind: input, shape index: {}]
  %s6 = inlined_call_operand.vmem [shape: f32[1,8], index: 6, kind: input, shape index: {}]
  %s7 = inlined_call_operand.vmem [shape: f32[32,128], index: 7, kind: output, shape index: {}]
  %s8 = sld [smem:[#allocation0]]
  $region38: #{up_unpool_forward.1} parent=0
    _
  %s10 = ssub.s32 1, %s8
  %s11 = scalar_select 0, %s10, %s8
  // Predicated region
  $region2: #{up_unpool_forward.1} parent=0 // pred_check
    _
  $region3: #{up_unpool_forward.1} parent=0 // pred_check_branch
    %13 = sbr.rel (0) target = $region5
  $region4: #{up_unpool_forward.1} parent=0 // pred_region
    _
  $region5: #{up_unpool_forward.1} parent=0 // pred_fallthru
    _
  // Predicated region
  $region6: #{up_unpool_forward.1} parent=0 // pred_check
    _
  $region7: #{up_unpool_forward.1} parent=0 // pred_check_branch
    %15 = sbr.rel (0) target = $region9
  $region8: #{up_unpool_forward.1} parent=0 // pred_region
    _
  $region9: #{up_unpool_forward.1} parent=0 // pred_fallthru
    _
  // Predicated region
  $region10: #{up_unpool_forward.1} parent=0 // pred_check
    _
  $region11: #{up_unpool_forward.1} parent=0 // pred_check_branch
    %17 = sbr.rel (0) target = $region13
  $region12: #{up_unpool_forward.1} parent=0 // pred_region
    _
  $region13: #{up_unpool_forward.1} parent=0 // pred_fallthru
    _
  // Predicated region
  $region14: #{up_unpool_forward.1} parent=0 // pred_check
    _
  $region15: #{up_unpool_forward.1} parent=0 // pred_check_branch
    %19 = sbr.rel (0) target = $region17
  $region16: #{up_unpool_forward.1} parent=0 // pred_region
    _
  $region17: #{up_unpool_forward.1} parent=0 // pred_fallthru
    _
  // Predicated region
  $region18: #{up_unpool_forward.1} parent=0 // pred_check
    _
  $region19: #{up_unpool_forward.1} parent=0 // pred_check_branch
    %21 = sbr.rel (0) target = $region21
  $region20: #{up_unpool_forward.1} parent=0 // pred_region
    _
  $region21: #{up_unpool_forward.1} parent=0 // pred_fallthru
    _
  // Predicated region
  $region22: #{up_unpool_forward.1} parent=0 // pred_check
    _
  $region23: #{up_unpool_forward.1} parent=0 // pred_check_branch
    %23 = sbr.rel (0) target = $region25
  $region24: #{up_unpool_forward.1} parent=0 // pred_region
    _
  $region25: #{up_unpool_forward.1} parent=0 // pred_fallthru
    _
  // Predicated region
  $region26: #{up_unpool_forward.1} parent=0 // pred_check
    _
  $region27: #{up_unpool_forward.1} parent=0 // pred_check_branch
    %25 = sbr.rel (0) target = $region29
  $region28: #{up_unpool_forward.1} parent=0 // pred_region
    _
  $region29: #{up_unpool_forward.1} parent=0 // pred_fallthru
    _
  %v27 = vld [vmem:[%s0] sm:$0xf]
  %v28 = vld [vmem:[%s0 + $0x4] sm:$0xf]
  %vm29 = vcmask 584704
  %30 = vst.msk [vmem:[#allocation2] sm:$0xf] %vm29, %v27
  %31 = vst.msk [vmem:[#allocation2 + $0x8] sm:$0xf] %vm29, %v28
  %v32 = vld [vmem:[%s0] sm:$0xf]
  %v33 = vld [vmem:[%s0 + $0x4] sm:$0xf]
  %v34 = vld [vmem:[%s0 + $0x8] sm:$0x1]
  %vm35 = vsmask.f32 3328
  %vm36 = vsmask.f32 7440
  %vm37 = vmor %vm35, %vm36
  %v39 = vshrl.u32 %v32, 16
  %v41 = vrot.slane %v39, 4
  %v42 = vshll.u32 %v32, 16
  %v44 = vrot.slane %v42, 5
  %v45 = vor.u32 %v41, %v44
  %v46 = vrot.slane %v45, 4
  %v48 = vshll.u32 %v33, 16
  %v50 = vrot.slane %v48, 5
  %v51 = vsel %vm37, %v46, %v50
  %v52 = vshrl.u32 %v33, 16
  %v54 = vrot.slane %v52, 4
  %v55 = vor.u32 %v54, %v50
  %v56 = vrot.slane %v55, 4
  %v58 = vshll.u32 %v34, 16
  %v60 = vrot.slane %v58, 5
  %v61 = vsel %vm37, %v56, %v60
  %62 = vrot.lane.b32.xlu0 %v51, 72
  %v63 = vpop.permute.xlu0 %62
  %64 = vrot.lane.b32.xlu0 %v61, 72
  %v65 = vpop.permute.xlu0 %64
  %v66 = vrot.slane %v63, 4
  %v67 = vrot.slane %v65, 4
  %vm68 = vcmask 588800
  %v69 = vsel %vm68, %v66, %v63
  %v70 = vsel %vm68, %v67, %v65
  %vm73 = vcmask 1044032
  %vm74 = vcmask 130052
  %vm75 = vmor %vm74, %vm73
  %76 = vst.msk [vmem:[#allocation2] sm:$0xff] %vm75, %v69
  %77 = vst.msk [vmem:[#allocation2 + $0x8] sm:$0xff] %vm75, %v70
  %v78 = vld [vmem:[%s0] sm:$0xe]
  %v79 = vld [vmem:[%s0 + $0x4] sm:$0xf]
  %v80 = vld [vmem:[%s0 + $0x8] sm:$0x1]
  %vm84 = vcmask 1042432
  %vm85 = vcmask 1046532
  %vm86 = vmor %vm84, %vm85
  %v87 = vrot.slane %v78, 5
  %v88 = vrot.slane %v87, 4
  %v89 = vrot.slane %v79, 5
  %v90 = vsel %vm86, %v88, %v89
  %v91 = vrot.slane %v89, 4
  %v92 = vrot.slane %v80, 5
  %v93 = vsel %vm86, %v91, %v92
  %94 = vrot.lane.b32.xlu0 %v90, 16
  %v95 = vpop.permute.xlu0 %94
  %96 = vrot.lane.b32.xlu0 %v93, 16
  %v97 = vpop.permute.xlu0 %96
  %vm100 = vcmask 715904
  %101 = vst.msk [vmem:[#allocation2 + $0x4] sm:$0xf] %vm100, %v95
  %102 = vst.msk [vmem:[#allocation2 + $0xc] sm:$0xf] %vm100, %v97
  %v103 = vld [vmem:[%s0 + $0x8] sm:$0xe]
  %v104 = vld [vmem:[%s0 + $0xc] sm:$0xf]
  %v105 = vld [vmem:[%s0 + $0x10] sm:$0x1]
  %v109 = vrot.slane %v103, 5
  %v110 = vrot.slane %v109, 4
  %v111 = vrot.slane %v104, 5
  %v112 = vsel %vm86, %v110, %v111
  %v113 = vrot.slane %v111, 4
  %v114 = vrot.slane %v105, 5
  %v115 = vsel %vm86, %v113, %v114
  %118 = vst.msk [vmem:[#allocation2 + $0x10] sm:$0xf] %vm29, %v112
  %119 = vst.msk [vmem:[#allocation2 + $0x18] sm:$0xf] %vm29, %v115
  %v120 = vld [vmem:[%s0 + $0x8] sm:$0xe]
  %v121 = vld [vmem:[%s0 + $0xc] sm:$0xf]
  %v122 = vld [vmem:[%s0 + $0x10] sm:$0x3]
  %vm123 = vsmask.f32 2304
  %vm124 = vsmask.f32 6416
  %vm125 = vmor %vm123, %vm124
  %v127 = vshrl.u32 %v120, 16
  %v129 = vrot.slane %v127, 5
  %v130 = vshll.u32 %v120, 16
  %v132 = vrot.slane %v130, 6
  %v133 = vor.u32 %v129, %v132
  %v134 = vrot.slane %v133, 4
  %v136 = vshrl.u32 %v121, 16
  %v138 = vrot.slane %v136, 5
  %v139 = vshll.u32 %v121, 16
  %v141 = vrot.slane %v139, 6
  %v142 = vor.u32 %v138, %v141
  %v143 = vsel %vm125, %v134, %v142
  %v144 = vrot.slane %v142, 4
  %v146 = vshrl.u32 %v122, 16
  %v148 = vrot.slane %v146, 5
  %v149 = vshll.u32 %v122, 16
  %v151 = vrot.slane %v149, 6
  %v152 = vor.u32 %v148, %v151
  %v153 = vsel %vm125, %v144, %v152
  %154 = vrot.lane.b32.xlu0 %v143, 72
  %v155 = vpop.permute.xlu0 %154
  %156 = vrot.lane.b32.xlu0 %v153, 72
  %v157 = vpop.permute.xlu0 %156
  %v158 = vrot.slane %v155, 4
  %v159 = vrot.slane %v157, 4
  %v160 = vsel %vm68, %v158, %v155
  %v161 = vsel %vm68, %v159, %v157
  %164 = vst.msk [vmem:[#allocation2 + $0x10] sm:$0xff] %vm75, %v160
  %165 = vst.msk [vmem:[#allocation2 + $0x18] sm:$0xff] %vm75, %v161
  %v166 = vld [vmem:[%s0 + $0x8] sm:$0xc]
  %v167 = vld [vmem:[%s0 + $0xc] sm:$0xf]
  %v168 = vld [vmem:[%s0 + $0x10] sm:$0x3]
  %vm172 = vcmask 1041408
  %vm173 = vcmask 1045508
  %vm174 = vmor %vm172, %vm173
  %v175 = vrot.slane %v166, 6
  %v176 = vrot.slane %v175, 4
  %v177 = vrot.slane %v167, 6
  %v178 = vsel %vm174, %v176, %v177
  %v179 = vrot.slane %v177, 4
  %v180 = vrot.slane %v168, 6
  %v181 = vsel %vm174, %v179, %v180
  %182 = vrot.lane.b32.xlu0 %v178, 16
  %v183 = vpop.permute.xlu0 %182
  %184 = vrot.lane.b32.xlu0 %v181, 16
  %v185 = vpop.permute.xlu0 %184
  %188 = vst.msk [vmem:[#allocation2 + $0x14] sm:$0xf] %vm100, %v183
  %189 = vst.msk [vmem:[#allocation2 + $0x1c] sm:$0xf] %vm100, %v185
  %v190 = vld [vmem:[#allocation2] sm:$0xff]
  %v191 = vld [vmem:[#allocation2 + $0x8] sm:$0xff]
  %v192 = vld [vmem:[#allocation2 + $0x10] sm:$0xff]
  %v193 = vld [vmem:[#allocation2 + $0x18] sm:$0xff]
  %v194 = vld [vmem:[%s1] sm:$0xf]
  %v195 = vld [vmem:[%s1 + $0x4] sm:$0xf]
  %v196 = vld [vmem:[%s1 + $0x8] sm:$0xf]
  %v197 = vld [vmem:[%s1 + $0xc] sm:$0xf]
  %v198 = vld [vmem:[%s1 + $0x10] sm:$0xf]
  %v199 = vld [vmem:[%s1 + $0x14] sm:$0xf]
  %v200 = vld [vmem:[%s1 + $0x18] sm:$0xf]
  %v201 = vld [vmem:[%s1 + $0x1c] sm:$0xf]
  %v202 = vld [vmem:[%s1 + $0x20] sm:$0xf]
  %v203 = vld [vmem:[%s1 + $0x24] sm:$0xf]
  %v204 = vld [vmem:[%s1 + $0x28] sm:$0xf]
  %v205 = vld [vmem:[%s1 + $0x2c] sm:$0xf]
  %v206 = vld [vmem:[%s1 + $0x30] sm:$0xf]
  %v207 = vld [vmem:[%s1 + $0x34] sm:$0xf]
  %v208 = vld [vmem:[%s1 + $0x38] sm:$0xf]
  %v209 = vld [vmem:[%s1 + $0x3c] sm:$0xf]
  %v210 = vld [vmem:[%s1 + $0x40] sm:$0xf]
  %v211 = vld [vmem:[%s1 + $0x44] sm:$0xf]
  %v212 = vld [vmem:[%s1 + $0x48] sm:$0xf]
  %v213 = vld [vmem:[%s1 + $0x4c] sm:$0xf]
  %v214 = vld [vmem:[%s1 + $0x50] sm:$0xf]
  %v215 = vld [vmem:[%s1 + $0x54] sm:$0xf]
  %v216 = vld [vmem:[%s1 + $0x58] sm:$0xf]
  %v217 = vld [vmem:[%s1 + $0x5c] sm:$0xf]
  %v218 = vld [vmem:[%s1 + $0x60] sm:$0xf]
  %v219 = vld [vmem:[%s1 + $0x64] sm:$0xf]
  %v220 = vld [vmem:[%s1 + $0x68] sm:$0xf]
  %v225 = vunpack.c.l.b16 %v190
  %v226 = vunpack.c.h.b16 %v190
  %v227 = vunpack.c.l.b16 %v191
  %v228 = vunpack.c.h.b16 %v191
  %v229 = vunpack.c.l.b16 %v192
  %v230 = vunpack.c.h.b16 %v192
  %v231 = vunpack.c.l.b16 %v193
  %v232 = vunpack.c.h.b16 %v193
  %v233 = vpack.c.b16 %v227, %v225
  %v234 = vpack.c.b16 %v228, %v226
  %v235 = vpack.c.b16 %v231, %v229
  %v236 = vpack.c.b16 %v232, %v230
  %v266 = vunpack.c.l.b16 %v194
  %v267 = vunpack.c.l.b16 %v195
  %v268 = vunpack.c.l.b16 %v196
  %v269 = vunpack.c.l.b16 %v197
  %v270 = vunpack.c.l.b16 %v198
  %v271 = vunpack.c.l.b16 %v199
  %v272 = vunpack.c.l.b16 %v200
  %v273 = vunpack.c.l.b16 %v201
  %v274 = vunpack.c.l.b16 %v202
  %v275 = vunpack.c.l.b16 %v203
  %v276 = vunpack.c.l.b16 %v204
  %v277 = vunpack.c.l.b16 %v205
  %v278 = vunpack.c.l.b16 %v206
  %v279 = vunpack.c.l.b16 %v207
  %v280 = vunpack.c.l.b16 %v208
  %v281 = vunpack.c.l.b16 %v209
  %v282 = vunpack.c.l.b16 %v210
  %v283 = vunpack.c.l.b16 %v211
  %v284 = vunpack.c.l.b16 %v212
  %v285 = vunpack.c.l.b16 %v213
  %v286 = vunpack.c.l.b16 %v214
  %v287 = vunpack.c.l.b16 %v215
  %v288 = vunpack.c.l.b16 %v216
  %v289 = vunpack.c.l.b16 %v217
  %v290 = vunpack.c.l.b16 %v218
  %v291 = vunpack.c.l.b16 %v219
  %v292 = vunpack.c.l.b16 %v220
  %v293 = vpack.c.b16 %v267, %v266
  %v294 = vpack.c.b16 %v269, %v268
  %v295 = vpack.c.b16 %v271, %v270
  %v296 = vpack.c.b16 %v273, %v272
  %v297 = vpack.c.b16 %v275, %v274
  %v298 = vpack.c.b16 %v277, %v276
  %v299 = vpack.c.b16 %v279, %v278
  %v300 = vpack.c.b16 %v281, %v280
  %v301 = vpack.c.b16 %v283, %v282
  %v302 = vpack.c.b16 %v285, %v284
  %v303 = vpack.c.b16 %v287, %v286
  %v304 = vpack.c.b16 %v289, %v288
  %v305 = vpack.c.b16 %v291, %v290
  %v306 = vpack.c.b16 %v292, %v292
  %vm320 = vcmask 719872
  %v322 = vsel %vm320, %v234, 0
  %v325 = vsel %vm320, %v236, 0
  %vm327 = vcmask 1043456
  %v329 = vsel %vm327, %v306, 0
  %331 = vmatprep.subr.bf16.mxu0 0
  %332 = vmatpush1.bf16.msra.mxu0 %v300
  %333 = vmatprep.subr.bf16.mxu0 0
  %334 = vmatpush1.bf16.msra.mxu0 %v299
  %335 = vmatprep.subr.bf16.mxu0 0
  %336 = vmatpush1.bf16.msra.mxu0 %v298
  %337 = vmatprep.subr.bf16.mxu0 0
  %338 = vmatpush1.bf16.msra.mxu0 %v297
  %339 = vmatprep.subr.bf16.mxu0 0
  %340 = vmatpush1.bf16.msra.mxu0 %v296
  %341 = vmatprep.subr.bf16.mxu0 0
  %342 = vmatpush1.bf16.msra.mxu0 %v295
  %343 = vmatprep.subr.bf16.mxu0 0
  %344 = vmatpush1.bf16.msra.mxu0 %v294
  %345 = vmatprep.subr.bf16.mxu0 0
  %346 = vmatpush1.bf16.msra.mxu0 %v293
  %347 = vmatprep.subr.bf16.mxu0 0
  %348 = vmatpush2.bf16.msra.mxu0 0
  %349 = vmatprep.subr.bf16.mxu0 0
  %350 = vmatpush2.bf16.msra.mxu0 0
  %351 = vmatprep.subr.bf16.mxu0 0
  %352 = vmatpush2.bf16.msra.mxu0 %v329
  %353 = vmatprep.subr.bf16.mxu0 0
  %354 = vmatpush2.bf16.msra.mxu0 %v305
  %355 = vmatprep.subr.bf16.mxu0 0
  %356 = vmatpush2.bf16.msra.mxu0 %v304
  %357 = vmatprep.subr.bf16.mxu0 0
  %358 = vmatpush2.bf16.msra.mxu0 %v303
  %359 = vmatprep.subr.bf16.mxu0 0
  %360 = vmatpush2.bf16.msra.mxu0 %v302
  %361 = vmatprep.subr.bf16.mxu0 0
  %362 = vmatpush2.bf16.msra.mxu0 %v301
  %363 = vmatprep.mubr.bf16.mxu0 %v322
  %364 = vmatmul.mubr.bf16.gmra.mxu0 %v233
  %v365 = vpop.f32.mrf.mxu0
  %v366 = vadd.f32 0.0, %v365
  %v367 = vpop.f32.mrf.mxu0
  %v368 = vpop.f32.mrf.mxu0
  %v369 = vadd.f32 0.0, %v368
  %v370 = vpop.f32.mrf.mxu0
  %371 = vmatprep.mubr.bf16.mxu0 %v325
  %372 = vmatmul.mubr.bf16.gmra.mxu0 %v235
  %v373 = vpop.f32.mrf.mxu0
  %v374 = vadd.f32 0.0, %v373
  %v375 = vpop.f32.mrf.mxu0
  %v376 = vpop.f32.mrf.mxu0
  %v377 = vadd.f32 0.0, %v376
  %v378 = vpop.f32.mrf.mxu0
  %379 = vdwg.mxu0
  %v380 = vlaneseq
  %v381 = vshrl.u32 %v380, 7
  %v382 = vadd.s32 %v381, 8
  %v383 = vadd.s32 %v381, 16
  %v384 = vadd.s32 %v381, 24
  %v385 = vadd.s32 %v381, 32
  %v386 = vadd.s32 %v381, 40
  %v387 = vadd.s32 %v381, 48
  %v388 = vadd.s32 %v381, 56
  %v389 = vadd.s32 %v381, 64
  %v390 = vadd.s32 %v381, 72
  %v391 = vadd.s32 %v381, 80
  %v392 = vadd.s32 %v381, 88
  %v393 = vadd.s32 %v381, 96
  %v394 = vadd.s32 %v381, 104
  %v395 = vadd.s32 %v381, 112
  %v396 = vadd.s32 %v381, 120
  %vm397 = vcmp.lt.s32.totalorder %v381, 0
  %v398 = vsub.s32 0, %v381
  %v399 = vsel %vm397, %v398, %v381
  %v400 = vshrl.u32 %v399, 3
  %v401 = vand.u32 %v399, 7
  %v402 = vsub.s32 0, %v401
  %v403 = vsel %vm397, %v402, %v401
  %vm404 = vcmp.lt.s32.totalorder %v382, 0
  %v405 = vsub.s32 0, %v382
  %v406 = vsel %vm404, %v405, %v382
  %v407 = vshrl.u32 %v406, 3
  %v408 = vand.u32 %v406, 7
  %v409 = vsub.s32 0, %v408
  %v410 = vsel %vm404, %v409, %v408
  %vm411 = vcmp.lt.s32.totalorder %v383, 0
  %v412 = vsub.s32 0, %v383
  %v413 = vsel %vm411, %v412, %v383
  %v414 = vshrl.u32 %v413, 3
  %v415 = vand.u32 %v413, 7
  %v416 = vsub.s32 0, %v415
  %v417 = vsel %vm411, %v416, %v415
  %vm418 = vcmp.lt.s32.totalorder %v384, 0
  %v419 = vsub.s32 0, %v384
  %v420 = vsel %vm418, %v419, %v384
  %v421 = vshrl.u32 %v420, 3
  %v422 = vand.u32 %v420, 7
  %v423 = vsub.s32 0, %v422
  %v424 = vsel %vm418, %v423, %v422
  %vm425 = vcmp.lt.s32.totalorder %v385, 0
  %v426 = vsub.s32 0, %v385
  %v427 = vsel %vm425, %v426, %v385
  %v428 = vshrl.u32 %v427, 3
  %v429 = vand.u32 %v427, 7
  %v430 = vsub.s32 0, %v429
  %v431 = vsel %vm425, %v430, %v429
  %vm432 = vcmp.lt.s32.totalorder %v386, 0
  %v433 = vsub.s32 0, %v386
  %v434 = vsel %vm432, %v433, %v386
  %v435 = vshrl.u32 %v434, 3
  %v436 = vand.u32 %v434, 7
  %v437 = vsub.s32 0, %v436
  %v438 = vsel %vm432, %v437, %v436
  %vm439 = vcmp.lt.s32.totalorder %v387, 0
  %v440 = vsub.s32 0, %v387
  %v441 = vsel %vm439, %v440, %v387
  %v442 = vshrl.u32 %v441, 3
  %v443 = vand.u32 %v441, 7
  %v444 = vsub.s32 0, %v443
  %v445 = vsel %vm439, %v444, %v443
  %vm446 = vcmp.lt.s32.totalorder %v388, 0
  %v447 = vsub.s32 0, %v388
  %v448 = vsel %vm446, %v447, %v388
  %v449 = vshrl.u32 %v448, 3
  %v450 = vand.u32 %v448, 7
  %v451 = vsub.s32 0, %v450
  %v452 = vsel %vm446, %v451, %v450
  %vm453 = vcmp.lt.s32.totalorder %v389, 0
  %v454 = vsub.s32 0, %v389
  %v455 = vsel %vm453, %v454, %v389
  %v456 = vshrl.u32 %v455, 3
  %v457 = vand.u32 %v455, 7
  %v458 = vsub.s32 0, %v457
  %v459 = vsel %vm453, %v458, %v457
  %vm460 = vcmp.lt.s32.totalorder %v390, 0
  %v461 = vsub.s32 0, %v390
  %v462 = vsel %vm460, %v461, %v390
  %v463 = vshrl.u32 %v462, 3
  %v464 = vand.u32 %v462, 7
  %v465 = vsub.s32 0, %v464
  %v466 = vsel %vm460, %v465, %v464
  %vm467 = vcmp.lt.s32.totalorder %v391, 0
  %v468 = vsub.s32 0, %v391
  %v469 = vsel %vm467, %v468, %v391
  %v470 = vshrl.u32 %v469, 3
  %v471 = vand.u32 %v469, 7
  %v472 = vsub.s32 0, %v471
  %v473 = vsel %vm467, %v472, %v471
  %vm474 = vcmp.lt.s32.totalorder %v392, 0
  %v475 = vsub.s32 0, %v392
  %v476 = vsel %vm474, %v475, %v392
  %v477 = vshrl.u32 %v476, 3
  %v478 = vand.u32 %v476, 7
  %v479 = vsub.s32 0, %v478
  %v480 = vsel %vm474, %v479, %v478
  %vm481 = vcmp.lt.s32.totalorder %v393, 0
  %v482 = vsub.s32 0, %v393
  %v483 = vsel %vm481, %v482, %v393
  %v484 = vshrl.u32 %v483, 3
  %v485 = vand.u32 %v483, 7
  %v486 = vsub.s32 0, %v485
  %v487 = vsel %vm481, %v486, %v485
  %vm488 = vcmp.lt.s32.totalorder %v394, 0
  %v489 = vsub.s32 0, %v394
  %v490 = vsel %vm488, %v489, %v394
  %v491 = vshrl.u32 %v490, 3
  %v492 = vand.u32 %v490, 7
  %v493 = vsub.s32 0, %v492
  %v494 = vsel %vm488, %v493, %v492
  %vm495 = vcmp.lt.s32.totalorder %v395, 0
  %v496 = vsub.s32 0, %v395
  %v497 = vsel %vm495, %v496, %v395
  %v498 = vshrl.u32 %v497, 3
  %v499 = vand.u32 %v497, 7
  %v500 = vsub.s32 0, %v499
  %v501 = vsel %vm495, %v500, %v499
  %vm502 = vcmp.lt.s32.totalorder %v396, 0
  %v503 = vsub.s32 0, %v396
  %v504 = vsel %vm502, %v503, %v396
  %v505 = vshrl.u32 %v504, 3
  %v506 = vand.u32 %v504, 7
  %v507 = vsub.s32 0, %v506
  %v508 = vsel %vm502, %v507, %v506
  %vm509 = vcmp.ne.s32.totalorder %v403, 0
  %vm510 = vcmp.ne.s32.totalorder %v410, 0
  %vm511 = vcmp.ne.s32.totalorder %v417, 0
  %vm512 = vcmp.ne.s32.totalorder %v424, 0
  %vm513 = vcmp.ne.s32.totalorder %v431, 0
  %vm514 = vcmp.ne.s32.totalorder %v438, 0
  %vm515 = vcmp.ne.s32.totalorder %v445, 0
  %vm516 = vcmp.ne.s32.totalorder %v452, 0
  %vm517 = vcmp.ne.s32.totalorder %v459, 0
  %vm518 = vcmp.ne.s32.totalorder %v466, 0
  %vm519 = vcmp.ne.s32.totalorder %v473, 0
  %vm520 = vcmp.ne.s32.totalorder %v480, 0
  %vm521 = vcmp.ne.s32.totalorder %v487, 0
  %vm522 = vcmp.ne.s32.totalorder %v494, 0
  %vm523 = vcmp.ne.s32.totalorder %v501, 0
  %vm524 = vcmp.ne.s32.totalorder %v508, 0
  %vm525 = vcmp.lt.s32.totalorder %v403, 0
  %vm526 = vcmp.lt.s32.totalorder %v410, 0
  %vm527 = vcmp.lt.s32.totalorder %v417, 0
  %vm528 = vcmp.lt.s32.totalorder %v424, 0
  %vm529 = vcmp.lt.s32.totalorder %v431, 0
  %vm530 = vcmp.lt.s32.totalorder %v438, 0
  %vm531 = vcmp.lt.s32.totalorder %v445, 0
  %vm532 = vcmp.lt.s32.totalorder %v452, 0
  %vm533 = vcmp.lt.s32.totalorder %v459, 0
  %vm534 = vcmp.lt.s32.totalorder %v466, 0
  %vm535 = vcmp.lt.s32.totalorder %v473, 0
  %vm536 = vcmp.lt.s32.totalorder %v480, 0
  %vm537 = vcmp.lt.s32.totalorder %v487, 0
  %vm538 = vcmp.lt.s32.totalorder %v494, 0
  %vm539 = vcmp.lt.s32.totalorder %v501, 0
  %vm540 = vcmp.lt.s32.totalorder %v508, 0
  %vm541 = vmand %vm525, %vm509
  %vm542 = vmand %vm526, %vm510
  %vm543 = vmand %vm527, %vm511
  %vm544 = vmand %vm528, %vm512
  %vm545 = vmand %vm529, %vm513
  %vm546 = vmand %vm530, %vm514
  %vm547 = vmand %vm531, %vm515
  %vm548 = vmand %vm532, %vm516
  %vm549 = vmand %vm533, %vm517
  %vm550 = vmand %vm534, %vm518
  %vm551 = vmand %vm535, %vm519
  %vm552 = vmand %vm536, %vm520
  %vm553 = vmand %vm537, %vm521
  %vm554 = vmand %vm538, %vm522
  %vm555 = vmand %vm539, %vm523
  %vm556 = vmand %vm540, %vm524
  %v557 = vadd.s32 %v403, 8
  %v558 = vadd.s32 %v410, 8
  %v559 = vadd.s32 %v417, 8
  %v560 = vadd.s32 %v424, 8
  %v561 = vadd.s32 %v431, 8
  %v562 = vadd.s32 %v438, 8
  %v563 = vadd.s32 %v445, 8
  %v564 = vadd.s32 %v452, 8
  %v565 = vadd.s32 %v459, 8
  %v566 = vadd.s32 %v466, 8
  %v567 = vadd.s32 %v473, 8
  %v568 = vadd.s32 %v480, 8
  %v569 = vadd.s32 %v487, 8
  %v570 = vadd.s32 %v494, 8
  %v571 = vadd.s32 %v501, 8
  %v572 = vadd.s32 %v508, 8
  %v573 = vsel %vm541, %v557, %v403
  %v574 = vsel %vm542, %v558, %v410
  %v575 = vsel %vm543, %v559, %v417
  %v576 = vsel %vm544, %v560, %v424
  %v577 = vsel %vm545, %v561, %v431
  %v578 = vsel %vm546, %v562, %v438
  %v579 = vsel %vm547, %v563, %v445
  %v580 = vsel %vm548, %v564, %v452
  %v581 = vsel %vm549, %v565, %v459
  %v582 = vsel %vm550, %v566, %v466
  %v583 = vsel %vm551, %v567, %v473
  %v584 = vsel %vm552, %v568, %v480
  %v585 = vsel %vm553, %v569, %v487
  %v586 = vsel %vm554, %v570, %v494
  %v587 = vsel %vm555, %v571, %v501
  %v588 = vsel %vm556, %v572, %v508
  %v589 = vlaneseq
  %v590 = vand.u32 %v589, 127
  %vm591 = vcmp.eq.s32.totalorder %v573, %v590
  %vm592 = vcmp.eq.s32.totalorder %v574, %v590
  %vm593 = vcmp.eq.s32.totalorder %v575, %v590
  %vm594 = vcmp.eq.s32.totalorder %v576, %v590
  %vm595 = vcmp.eq.s32.totalorder %v577, %v590
  %vm596 = vcmp.eq.s32.totalorder %v578, %v590
  %vm597 = vcmp.eq.s32.totalorder %v579, %v590
  %vm598 = vcmp.eq.s32.totalorder %v580, %v590
  %vm599 = vcmp.eq.s32.totalorder %v581, %v590
  %vm600 = vcmp.eq.s32.totalorder %v582, %v590
  %vm601 = vcmp.eq.s32.totalorder %v583, %v590
  %vm602 = vcmp.eq.s32.totalorder %v584, %v590
  %vm603 = vcmp.eq.s32.totalorder %v585, %v590
  %vm604 = vcmp.eq.s32.totalorder %v586, %v590
  %vm605 = vcmp.eq.s32.totalorder %v587, %v590
  %vm606 = vcmp.eq.s32.totalorder %v588, %v590
  %v607 = vsel %vm591, 1, 0
  %v608 = vsel %vm592, 1, 0
  %v609 = vsel %vm593, 1, 0
  %v610 = vsel %vm594, 1, 0
  %v611 = vsel %vm595, 1, 0
  %v612 = vsel %vm596, 1, 0
  %v613 = vsel %vm597, 1, 0
  %v614 = vsel %vm598, 1, 0
  %v615 = vsel %vm599, 1, 0
  %v616 = vsel %vm600, 1, 0
  %v617 = vsel %vm601, 1, 0
  %v618 = vsel %vm602, 1, 0
  %v619 = vsel %vm603, 1, 0
  %v620 = vsel %vm604, 1, 0
  %v621 = vsel %vm605, 1, 0
  %v622 = vsel %vm606, 1, 0
  %v623 = vcvt.s32.f32 %v607
  %v624 = vcvt.s32.f32 %v608
  %v625 = vcvt.s32.f32 %v609
  %v626 = vcvt.s32.f32 %v610
  %v627 = vcvt.s32.f32 %v611
  %v628 = vcvt.s32.f32 %v612
  %v629 = vcvt.s32.f32 %v613
  %v630 = vcvt.s32.f32 %v614
  %v631 = vcvt.s32.f32 %v615
  %v632 = vcvt.s32.f32 %v616
  %v633 = vcvt.s32.f32 %v617
  %v634 = vcvt.s32.f32 %v618
  %v635 = vcvt.s32.f32 %v619
  %v636 = vcvt.s32.f32 %v620
  %v637 = vcvt.s32.f32 %v621
  %v638 = vcvt.s32.f32 %v622
  %vm639 = vcmp.lt.s32.totalorder %v590, 0
  %v640 = vsub.s32 0, %v590
  %v641 = vsel %vm639, %v640, %v590
  %v642 = vshrl.u32 %v641, 3
  %v643 = vand.u32 %v641, 7
  %v644 = vsub.s32 0, %v643
  %v645 = vsel %vm639, %v644, %v643
  %vm646 = vcmp.ne.s32.totalorder %v645, 0
  %vm647 = vcmp.lt.s32.totalorder %v645, 0
  %vm648 = vmand %vm647, %vm646
  %v649 = vadd.s32 %v645, 8
  %v650 = vsel %vm648, %v649, %v645
  %vm651 = vcmp.eq.s32.totalorder %v381, %v650
  %v652 = vsel %vm651, 1, 0
  %v653 = vcvt.s32.f32 %v652
  %v654 = vadd.f32 %v366, %v369
  %v655 = vadd.f32 %v654, %v374
  %v656 = vadd.f32 %v655, %v377
  %v657 = vrot.slane %v656, 4
  %v658 = vadd.f32 %v656, %v657
  %v659 = vrot.slane %v658, 2
  %v660 = vadd.f32 %v658, %v659
  %v661 = vrot.slane %v660, 1
  %v662 = vadd.f32 %v660, %v661
  %663 = vmatprep.subr.mxu0 0.0
  %664 = vmatpush1.msra.mxu0 %v638
  %665 = vmatprep.subr.mxu0 0.0
  %666 = vmatpush1.msra.mxu0 %v637
  %667 = vmatprep.subr.mxu0 0.0
  %668 = vmatpush1.msra.mxu0 %v636
  %669 = vmatprep.subr.mxu0 0.0
  %670 = vmatpush1.msra.mxu0 %v635
  %671 = vmatprep.subr.mxu0 0.0
  %672 = vmatpush1.msra.mxu0 %v634
  %673 = vmatprep.subr.mxu0 0.0
  %674 = vmatpush1.msra.mxu0 %v633
  %675 = vmatprep.subr.mxu0 0.0
  %676 = vmatpush1.msra.mxu0 %v632
  %677 = vmatprep.subr.mxu0 0.0
  %678 = vmatpush1.msra.mxu0 %v631
  %679 = vmatprep.subr.mxu0 0.0
  %680 = vmatpush1.msra.mxu0 %v630
  %681 = vmatprep.subr.mxu0 0.0
  %682 = vmatpush1.msra.mxu0 %v629
  %683 = vmatprep.subr.mxu0 0.0
  %684 = vmatpush1.msra.mxu0 %v628
  %685 = vmatprep.subr.mxu0 0.0
  %686 = vmatpush1.msra.mxu0 %v627
  %687 = vmatprep.subr.mxu0 0.0
  %688 = vmatpush1.msra.mxu0 %v626
  %689 = vmatprep.subr.mxu0 0.0
  %690 = vmatpush1.msra.mxu0 %v625
  %691 = vmatprep.subr.mxu0 0.0
  %692 = vmatpush1.msra.mxu0 %v624
  %693 = vmatprep.subr.mxu0 0.0
  %694 = vmatpush1.msra.mxu0 %v623
  %695 = vmatprep.subr.mxu0 0.0
  %696 = vmatpush2.msra.mxu0 0.0
  %697 = vmatprep.subr.mxu0 0.0
  %698 = vmatpush2.msra.mxu0 0.0
  %699 = vmatprep.subr.mxu0 0.0
  %700 = vmatpush2.msra.mxu0 0.0
  %701 = vmatprep.subr.mxu0 0.0
  %702 = vmatpush2.msra.mxu0 0.0
  %703 = vmatprep.subr.mxu0 0.0
  %704 = vmatpush2.msra.mxu0 0.0
  %705 = vmatprep.subr.mxu0 0.0
  %706 = vmatpush2.msra.mxu0 0.0
  %707 = vmatprep.subr.mxu0 0.0
  %708 = vmatpush2.msra.mxu0 0.0
  %709 = vmatprep.subr.mxu0 0.0
  %710 = vmatpush2.msra.mxu0 0.0
  %711 = vmatprep.subr.mxu0 0.0
  %712 = vmatpush2.msra.mxu0 0.0
  %713 = vmatprep.subr.mxu0 0.0
  %714 = vmatpush2.msra.mxu0 0.0
  %715 = vmatprep.subr.mxu0 0.0
  %716 = vmatpush2.msra.mxu0 0.0
  %717 = vmatprep.subr.mxu0 0.0
  %718 = vmatpush2.msra.mxu0 0.0
  %719 = vmatprep.subr.mxu0 0.0
  %720 = vmatpush2.msra.mxu0 0.0
  %721 = vmatprep.subr.mxu0 0.0
  %722 = vmatpush2.msra.mxu0 0.0
  %723 = vmatprep.subr.mxu0 0.0
  %724 = vmatpush2.msra.mxu0 0.0
  %725 = vmatprep.subr.mxu0 0.0
  %726 = vmatpush2.msra.mxu0 0.0
  %727 = vmatprep.mubr.f32.mxu0 0.0
  %728 = vmatmul.mubr.f32.gmra.mxu0 %v662
  %v729 = vpop.f32.mrf.mxu0
  %v730 = vadd.f32 0.0, %v729
  %v731 = vpop.f32.mrf.mxu0
  %732 = vdwg.mxu0
  %v733 = vmul.f32 %v366, %v366
  %v734 = vmul.f32 %v369, %v369
  %v735 = vmul.f32 %v374, %v374
  %v736 = vmul.f32 %v377, %v377
  %v737 = vadd.f32 %v733, %v734
  %v738 = vadd.f32 %v737, %v735
  %v739 = vadd.f32 %v738, %v736
  %v740 = vrot.slane %v739, 4
  %v741 = vadd.f32 %v739, %v740
  %v742 = vrot.slane %v741, 2
  %v743 = vadd.f32 %v741, %v742
  %v744 = vrot.slane %v743, 1
  %v745 = vadd.f32 %v743, %v744
  %746 = vmatprep.subr.mxu0 0.0
  %747 = vmatpush1.msra.mxu0 %v638
  %748 = vmatprep.subr.mxu0 0.0
  %749 = vmatpush1.msra.mxu0 %v637
  %750 = vmatprep.subr.mxu0 0.0
  %751 = vmatpush1.msra.mxu0 %v636
  %752 = vmatprep.subr.mxu0 0.0
  %753 = vmatpush1.msra.mxu0 %v635
  %754 = vmatprep.subr.mxu0 0.0
  %755 = vmatpush1.msra.mxu0 %v634
  %756 = vmatprep.subr.mxu0 0.0
  %757 = vmatpush1.msra.mxu0 %v633
  %758 = vmatprep.subr.mxu0 0.0
  %759 = vmatpush1.msra.mxu0 %v632
  %760 = vmatprep.subr.mxu0 0.0
  %761 = vmatpush1.msra.mxu0 %v631
  %762 = vmatprep.subr.mxu0 0.0
  %763 = vmatpush1.msra.mxu0 %v630
  %764 = vmatprep.subr.mxu0 0.0
  %765 = vmatpush1.msra.mxu0 %v629
  %766 = vmatprep.subr.mxu0 0.0
  %767 = vmatpush1.msra.mxu0 %v628
  %768 = vmatprep.subr.mxu0 0.0
  %769 = vmatpush1.msra.mxu0 %v627
  %770 = vmatprep.subr.mxu0 0.0
  %771 = vmatpush1.msra.mxu0 %v626
  %772 = vmatprep.subr.mxu0 0.0
  %773 = vmatpush1.msra.mxu0 %v625
  %774 = vmatprep.subr.mxu0 0.0
  %775 = vmatpush1.msra.mxu0 %v624
  %776 = vmatprep.subr.mxu0 0.0
  %777 = vmatpush1.msra.mxu0 %v623
  %778 = vmatprep.subr.mxu0 0.0
  %779 = vmatpush2.msra.mxu0 0.0
  %780 = vmatprep.subr.mxu0 0.0
  %781 = vmatpush2.msra.mxu0 0.0
  %782 = vmatprep.subr.mxu0 0.0
  %783 = vmatpush2.msra.mxu0 0.0
  %784 = vmatprep.subr.mxu0 0.0
  %785 = vmatpush2.msra.mxu0 0.0
  %786 = vmatprep.subr.mxu0 0.0
  %787 = vmatpush2.msra.mxu0 0.0
  %788 = vmatprep.subr.mxu0 0.0
  %789 = vmatpush2.msra.mxu0 0.0
  %790 = vmatprep.subr.mxu0 0.0
  %791 = vmatpush2.msra.mxu0 0.0
  %792 = vmatprep.subr.mxu0 0.0
  %793 = vmatpush2.msra.mxu0 0.0
  %794 = vmatprep.subr.mxu0 0.0
  %795 = vmatpush2.msra.mxu0 0.0
  %796 = vmatprep.subr.mxu0 0.0
  %797 = vmatpush2.msra.mxu0 0.0
  %798 = vmatprep.subr.mxu0 0.0
  %799 = vmatpush2.msra.mxu0 0.0
  %800 = vmatprep.subr.mxu0 0.0
  %801 = vmatpush2.msra.mxu0 0.0
  %802 = vmatprep.subr.mxu0 0.0
  %803 = vmatpush2.msra.mxu0 0.0
  %804 = vmatprep.subr.mxu0 0.0
  %805 = vmatpush2.msra.mxu0 0.0
  %806 = vmatprep.subr.mxu0 0.0
  %807 = vmatpush2.msra.mxu0 0.0
  %808 = vmatprep.subr.mxu0 0.0
  %809 = vmatpush2.msra.mxu0 0.0
  %810 = vmatprep.mubr.f32.mxu0 0.0
  %811 = vmatmul.mubr.f32.gmra.mxu0 %v745
  %v812 = vpop.f32.mrf.mxu0
  %v813 = vadd.f32 0.0, %v812
  %v814 = vpop.f32.mrf.mxu0
  %815 = vdwg.mxu0
  %v816 = vmul.f32 %v730, 0.001953125
  %v817 = vmul.f32 %v813, 0.001953125
  %v818 = vmul.f32 %v816, %v816
  %v819 = vsub.f32 %v817, %v818
  %v820 = vld [vmem:[%s3] sm:$0x1]
  %v821 = vadd.f32 %v819, 1e-05
  %v822 = vrsqrt.pop %v821
  %v823 = vmul.f32 %v820, %v822
  %v824 = vld [vmem:[%s4] sm:$0x1]
  %v825 = vmul.f32 %v816, %v823
  %v826 = vsub.f32 %v824, %v825
  %vm827 = vcmask 64512
  %v829 = vsel %vm827, %v823, 0
  %831 = vmatprep.subr.mxu0 0.0
  %832 = vmatpush1.msra.mxu0 0.0
  %833 = vmatprep.subr.mxu0 0.0
  %834 = vmatpush1.msra.mxu0 0.0
  %835 = vmatprep.subr.mxu0 0.0
  %836 = vmatpush1.msra.mxu0 0.0
  %837 = vmatprep.subr.mxu0 0.0
  %838 = vmatpush1.msra.mxu0 0.0
  %839 = vmatprep.subr.mxu0 0.0
  %840 = vmatpush1.msra.mxu0 0.0
  %841 = vmatprep.subr.mxu0 0.0
  %842 = vmatpush1.msra.mxu0 0.0
  %843 = vmatprep.subr.mxu0 0.0
  %844 = vmatpush1.msra.mxu0 0.0
  %845 = vmatprep.subr.mxu0 0.0
  %846 = vmatpush1.msra.mxu0 0.0
  %847 = vmatprep.subr.mxu0 0.0
  %848 = vmatpush1.msra.mxu0 0.0
  %849 = vmatprep.subr.mxu0 0.0
  %850 = vmatpush1.msra.mxu0 0.0
  %851 = vmatprep.subr.mxu0 0.0
  %852 = vmatpush1.msra.mxu0 0.0
  %853 = vmatprep.subr.mxu0 0.0
  %854 = vmatpush1.msra.mxu0 0.0
  %855 = vmatprep.subr.mxu0 0.0
  %856 = vmatpush1.msra.mxu0 0.0
  %857 = vmatprep.subr.mxu0 0.0
  %858 = vmatpush1.msra.mxu0 0.0
  %859 = vmatprep.subr.mxu0 0.0
  %860 = vmatpush1.msra.mxu0 0.0
  %861 = vmatprep.subr.mxu0 0.0
  %862 = vmatpush1.msra.mxu0 %v653
  %863 = vmatprep.subr.mxu0 0.0
  %864 = vmatpush2.msra.mxu0 0.0
  %865 = vmatprep.subr.mxu0 0.0
  %866 = vmatpush2.msra.mxu0 0.0
  %867 = vmatprep.subr.mxu0 0.0
  %868 = vmatpush2.msra.mxu0 0.0
  %869 = vmatprep.subr.mxu0 0.0
  %870 = vmatpush2.msra.mxu0 0.0
  %871 = vmatprep.subr.mxu0 0.0
  %872 = vmatpush2.msra.mxu0 0.0
  %873 = vmatprep.subr.mxu0 0.0
  %874 = vmatpush2.msra.mxu0 0.0
  %875 = vmatprep.subr.mxu0 0.0
  %876 = vmatpush2.msra.mxu0 0.0
  %877 = vmatprep.subr.mxu0 0.0
  %878 = vmatpush2.msra.mxu0 0.0
  %879 = vmatprep.subr.mxu0 0.0
  %880 = vmatpush2.msra.mxu0 0.0
  %881 = vmatprep.subr.mxu0 0.0
  %882 = vmatpush2.msra.mxu0 0.0
  %883 = vmatprep.subr.mxu0 0.0
  %884 = vmatpush2.msra.mxu0 0.0
  %885 = vmatprep.subr.mxu0 0.0
  %886 = vmatpush2.msra.mxu0 0.0
  %887 = vmatprep.subr.mxu0 0.0
  %888 = vmatpush2.msra.mxu0 0.0
  %889 = vmatprep.subr.mxu0 0.0
  %890 = vmatpush2.msra.mxu0 0.0
  %891 = vmatprep.subr.mxu0 0.0
  %892 = vmatpush2.msra.mxu0 0.0
  %893 = vmatprep.subr.mxu0 0.0
  %894 = vmatpush2.msra.mxu0 0.0
  %895 = vmatprep.mubr.f32.mxu0 0.0
  %896 = vmatmul.mubr.f32.gmra.mxu0 %v829
  %v897 = vpop.f32.mrf.mxu0
  %v898 = vadd.f32 0.0, %v897
  %v899 = vpop.f32.mrf.mxu0
  %900 = vdwg.mxu0
  %v902 = vsel %vm827, %v826, 0
  %904 = vmatprep.subr.mxu0 0.0
  %905 = vmatpush1.msra.mxu0 0.0
  %906 = vmatprep.subr.mxu0 0.0
  %907 = vmatpush1.msra.mxu0 0.0
  %908 = vmatprep.subr.mxu0 0.0
  %909 = vmatpush1.msra.mxu0 0.0
  %910 = vmatprep.subr.mxu0 0.0
  %911 = vmatpush1.msra.mxu0 0.0
  %912 = vmatprep.subr.mxu0 0.0
  %913 = vmatpush1.msra.mxu0 0.0
  %914 = vmatprep.subr.mxu0 0.0
  %915 = vmatpush1.msra.mxu0 0.0
  %916 = vmatprep.subr.mxu0 0.0
  %917 = vmatpush1.msra.mxu0 0.0
  %918 = vmatprep.subr.mxu0 0.0
  %919 = vmatpush1.msra.mxu0 0.0
  %920 = vmatprep.subr.mxu0 0.0
  %921 = vmatpush1.msra.mxu0 0.0
  %922 = vmatprep.subr.mxu0 0.0
  %923 = vmatpush1.msra.mxu0 0.0
  %924 = vmatprep.subr.mxu0 0.0
  %925 = vmatpush1.msra.mxu0 0.0
  %926 = vmatprep.subr.mxu0 0.0
  %927 = vmatpush1.msra.mxu0 0.0
  %928 = vmatprep.subr.mxu0 0.0
  %929 = vmatpush1.msra.mxu0 0.0
  %930 = vmatprep.subr.mxu0 0.0
  %931 = vmatpush1.msra.mxu0 0.0
  %932 = vmatprep.subr.mxu0 0.0
  %933 = vmatpush1.msra.mxu0 0.0
  %934 = vmatprep.subr.mxu0 0.0
  %935 = vmatpush1.msra.mxu0 %v653
  %936 = vmatprep.subr.mxu0 0.0
  %937 = vmatpush2.msra.mxu0 0.0
  %938 = vmatprep.subr.mxu0 0.0
  %939 = vmatpush2.msra.mxu0 0.0
  %940 = vmatprep.subr.mxu0 0.0
  %941 = vmatpush2.msra.mxu0 0.0
  %942 = vmatprep.subr.mxu0 0.0
  %943 = vmatpush2.msra.mxu0 0.0
  %944 = vmatprep.subr.mxu0 0.0
  %945 = vmatpush2.msra.mxu0 0.0
  %946 = vmatprep.subr.mxu0 0.0
  %947 = vmatpush2.msra.mxu0 0.0
  %948 = vmatprep.subr.mxu0 0.0
  %949 = vmatpush2.msra.mxu0 0.0
  %950 = vmatprep.subr.mxu0 0.0
  %951 = vmatpush2.msra.mxu0 0.0
  %952 = vmatprep.subr.mxu0 0.0
  %953 = vmatpush2.msra.mxu0 0.0
  %954 = vmatprep.subr.mxu0 0.0
  %955 = vmatpush2.msra.mxu0 0.0
  %956 = vmatprep.subr.mxu0 0.0
  %957 = vmatpush2.msra.mxu0 0.0
  %958 = vmatprep.subr.mxu0 0.0
  %959 = vmatpush2.msra.mxu0 0.0
  %960 = vmatprep.subr.mxu0 0.0
  %961 = vmatpush2.msra.mxu0 0.0
  %962 = vmatprep.subr.mxu0 0.0
  %963 = vmatpush2.msra.mxu0 0.0
  %964 = vmatprep.subr.mxu0 0.0
  %965 = vmatpush2.msra.mxu0 0.0
  %966 = vmatprep.subr.mxu0 0.0
  %967 = vmatpush2.msra.mxu0 0.0
  %968 = vmatprep.mubr.f32.mxu0 0.0
  %969 = vmatmul.mubr.f32.gmra.mxu0 %v902
  %v970 = vpop.f32.mrf.mxu0
  %v971 = vadd.f32 0.0, %v970
  %v972 = vpop.f32.mrf.mxu0
  %973 = vdwg.mxu0
  %v974 = vlaneseq
  %v975 = vshrl.u32 %v974, 7
  %v976 = vsub.s32 0, %v975
  %v977 = vrot.slane %v898, %v976
  %v978 = vmul.f32 %v366, %v977
  %v979 = vmul.f32 %v369, %v977
  %v980 = vmul.f32 %v374, %v977
  %v981 = vmul.f32 %v377, %v977
  %v982 = vlaneseq
  %v983 = vshrl.u32 %v982, 7
  %v984 = vsub.s32 0, %v983
  %v985 = vrot.slane %v971, %v984
  %v986 = vadd.f32 %v978, %v985
  %v987 = vadd.f32 %v979, %v985
  %v988 = vadd.f32 %v980, %v985
  %v989 = vadd.f32 %v981, %v985
  %v990 = vmax.f32 %v986, 0.0
  %v991 = vmax.f32 %v987, 0.0
  %v992 = vmax.f32 %v988, 0.0
  %v993 = vmax.f32 %v989, 0.0
  %vm994 = vmor %vm74, %vm327
  %995 = vst.msk [vmem:[#allocation3] sm:$0xff] %vm994, 0
  %996 = vst.msk [vmem:[#allocation3 + $0x8] sm:$0xff] %vm994, 0
  %997 = vst.msk [vmem:[#allocation3 + $0x10] sm:$0xff] %vm994, 0
  %998 = vst.msk [vmem:[#allocation3 + $0x18] sm:$0xff] %vm994, 0
  %vm999 = vcmask 1041408
  %vm1000 = vcmask 128004
  %vm1001 = vmor %vm1000, %vm999
  %1002 = vst.msk [vmem:[#allocation3 + $0x20] sm:$0x33] %vm1001, 0
  %v1003 = vpack.c.bf16 %v991, %v990
  %v1005 = vunpack.c.l.b16 %v1003
  %v1006 = vunpack.c.h.b16 %v1003
  %v1007 = vpack.c.b16 %v1005, %v1005
  %v1008 = vpack.c.b16 %v1006, %v1006
  %vm1009 = vsmask.f32 256
  %vm1010 = vsmask.f32 4368
  %vm1011 = vmor %vm1009, %vm1010
  %v1013 = vshrl.u32 %v1007, 16
  %v1015 = vrot.slane %v1013, 7
  %v1016 = vshll.u32 %v1007, 16
  %v1018 = vor.u32 %v1015, %v1016
  %v1019 = vrot.slane %v1015, 4
  %v1021 = vshrl.u32 %v1008, 16
  %v1023 = vrot.slane %v1021, 7
  %v1024 = vshll.u32 %v1008, 16
  %v1026 = vor.u32 %v1023, %v1024
  %v1027 = vsel %vm1011, %v1019, %v1026
  %v1028 = vrot.slane %v1023, 4
  %1029 = vrot.lane.b32.xlu0 %v1018, 8
  %v1030 = vpop.permute.xlu0 %1029
  %1031 = vrot.lane.b32.xlu0 %v1027, 8
  %v1032 = vpop.permute.xlu0 %1031
  %1033 = vrot.lane.b32.xlu0 %v1028, 8
  %v1034 = vpop.permute.xlu0 %1033
  %v1035 = vrot.slane %v1030, 4
  %v1036 = vrot.slane %v1032, 4
  %v1037 = vrot.slane %v1034, 4
  %vm1038 = vcmask 64512
  %v1039 = vsel %vm1038, %v1035, %v1030
  %v1040 = vsel %vm1038, %v1036, %v1032
  %v1041 = vsel %vm1038, %v1037, %v1034
  %vm1045 = vcmask 1043520
  %vm1046 = vsmask.f32 7938
  %vm1047 = vmand %vm1045, %vm1046
  %vm1048 = vcmask 64516
  %vm1049 = vsmask.f32 7954
  %vm1050 = vmand %vm1048, %vm1049
  %vm1051 = vmor %vm1050, %vm1047
  %v1052 = vld [vmem:[#allocation3] sm:$0xff]
  %v1053 = vsel %vm1051, %v1039, %v1052
  %1054 = vst [vmem:[#allocation3] sm:$0xff] %v1053
  %vm1055 = vcmask 1043520
  %vm1056 = vcmask 64516
  %vm1057 = vmor %vm1056, %vm1055
  %1058 = vst.msk [vmem:[#allocation3 + $0x8] sm:$0xff] %vm1057, %v1040
  %vm1059 = vcmask 1040448
  %vm1060 = vmand %vm1059, %vm1009
  %vm1061 = vcmask 61444
  %vm1062 = vsmask.f32 4352
  %vm1063 = vmand %vm1061, %vm1062
  %vm1064 = vmor %vm1063, %vm1060
  %v1065 = vld [vmem:[#allocation3 + $0x10] sm:$0x11]
  %v1066 = vsel %vm1064, %v1041, %v1065
  %1067 = vst [vmem:[#allocation3 + $0x10] sm:$0x11] %v1066
  %v1068 = vpack.c.bf16 %v993, %v992
  %v1070 = vunpack.c.l.b16 %v1068
  %v1071 = vunpack.c.h.b16 %v1068
  %v1072 = vpack.c.b16 %v1070, %v1070
  %v1073 = vpack.c.b16 %v1071, %v1071
  %vm1074 = vsmask.f32 1280
  %vm1075 = vsmask.f32 5392
  %vm1076 = vmor %vm1074, %vm1075
  %v1078 = vshrl.u32 %v1072, 16
  %v1080 = vrot.slane %v1078, 6
  %v1081 = vshll.u32 %v1072, 16
  %v1083 = vrot.slane %v1081, 7
  %v1084 = vor.u32 %v1080, %v1083
  %v1085 = vrot.slane %v1084, 4
  %v1087 = vshrl.u32 %v1073, 16
  %v1089 = vrot.slane %v1087, 6
  %v1090 = vshll.u32 %v1073, 16
  %v1092 = vrot.slane %v1090, 7
  %v1093 = vor.u32 %v1089, %v1092
  %v1094 = vsel %vm1076, %v1085, %v1093
  %v1095 = vrot.slane %v1093, 4
  %1096 = vrot.lane.b32.xlu0 %v1084, 8
  %v1097 = vpop.permute.xlu0 %1096
  %1098 = vrot.lane.b32.xlu0 %v1094, 8
  %v1099 = vpop.permute.xlu0 %1098
  %1100 = vrot.lane.b32.xlu0 %v1095, 8
  %v1101 = vpop.permute.xlu0 %1100
  %v1102 = vrot.slane %v1097, 4
  %v1103 = vrot.slane %v1099, 4
  %v1104 = vrot.slane %v1101, 4
  %v1105 = vsel %vm1038, %v1102, %v1097
  %v1106 = vsel %vm1038, %v1103, %v1099
  %v1107 = vsel %vm1038, %v1104, %v1101
  %vm1111 = vcmask 1043521
  %vm1112 = vsmask.f32 7942
  %vm1113 = vmand %vm1111, %vm1112
  %vm1114 = vcmask 64517
  %vm1115 = vsmask.f32 7958
  %vm1116 = vmand %vm1114, %vm1115
  %vm1117 = vmor %vm1116, %vm1113
  %v1118 = vld [vmem:[#allocation3 + $0x10] sm:$0xee]
  %v1119 = vsel %vm1117, %v1105, %v1118
  %1120 = vst [vmem:[#allocation3 + $0x10] sm:$0xee] %v1119
  %1121 = vst.msk [vmem:[#allocation3 + $0x18] sm:$0xff] %vm1057, %v1106
  %vm1122 = vcmask 1041472
  %vm1123 = vmand %vm1122, %vm1074
  %vm1124 = vcmask 62468
  %vm1125 = vsmask.f32 5376
  %vm1126 = vmand %vm1124, %vm1125
  %vm1127 = vmor %vm1126, %vm1123
  %v1128 = vld [vmem:[#allocation3 + $0x20] sm:$0x33]
  %v1129 = vsel %vm1127, %v1107, %v1128
  %1130 = vst [vmem:[#allocation3 + $0x20] sm:$0x33] %v1129
  %v1131 = vld [vmem:[#allocation3] sm:$0xff]
  %v1132 = vld [vmem:[#allocation3 + $0x8] sm:$0xff]
  %1133 = vst.msk [vmem:[#allocation4] sm:$0xff] %vm994, %v1131
  %1134 = vst.msk [vmem:[#allocation4 + $0x10] sm:$0xff] %vm994, %v1132
  %v1135 = vld [vmem:[#allocation3] sm:$0xff]
  %v1136 = vld [vmem:[#allocation3 + $0x8] sm:$0xff]
  %v1137 = vld [vmem:[#allocation3 + $0x10] sm:$0x11]
  %v1139 = vshrl.u32 %v1135, 16
  %v1141 = vrot.slane %v1139, 4
  %v1142 = vshll.u32 %v1135, 16
  %v1144 = vrot.slane %v1142, 5
  %v1145 = vor.u32 %v1141, %v1144
  %v1146 = vrot.slane %v1145, 4
  %v1148 = vshll.u32 %v1136, 16
  %v1150 = vrot.slane %v1148, 5
  %v1151 = vsel %vm37, %v1146, %v1150
  %v1152 = vshrl.u32 %v1136, 16
  %v1154 = vrot.slane %v1152, 4
  %v1155 = vor.u32 %v1154, %v1150
  %v1156 = vrot.slane %v1155, 4
  %v1158 = vshll.u32 %v1137, 16
  %v1160 = vrot.slane %v1158, 5
  %v1161 = vsel %vm37, %v1156, %v1160
  %1162 = vrot.lane.b32.xlu0 %v1151, 16
  %v1163 = vpop.permute.xlu0 %1162
  %1164 = vrot.lane.b32.xlu0 %v1161, 16
  %v1165 = vpop.permute.xlu0 %1164
  %v1166 = vrot.slane %v1163, 4
  %v1167 = vrot.slane %v1165, 4
  %vm1168 = vcmask 130048
  %v1169 = vsel %vm1168, %v1166, %v1163
  %v1170 = vsel %vm1168, %v1167, %v1165
  %vm1173 = vcmask 1043584
  %vm1174 = vcmask 261124
  %vm1175 = vmor %vm1174, %vm1173
  %1176 = vst.msk [vmem:[#allocation4 + $0x4] sm:$0xff] %vm1175, %v1169
  %1177 = vst.msk [vmem:[#allocation4 + $0x14] sm:$0xff] %vm1175, %v1170
  %v1178 = vld [vmem:[#allocation3] sm:$0xee]
  %v1179 = vld [vmem:[#allocation3 + $0x8] sm:$0xff]
  %v1180 = vld [vmem:[#allocation3 + $0x10] sm:$0x11]
  %v1184 = vrot.slane %v1178, 5
  %v1185 = vrot.slane %v1184, 4
  %v1186 = vrot.slane %v1179, 5
  %v1187 = vsel %vm86, %v1185, %v1186
  %v1188 = vrot.slane %v1186, 4
  %v1189 = vrot.slane %v1180, 5
  %v1190 = vsel %vm86, %v1188, %v1189
  %1191 = vrot.lane.b32.xlu0 %v1187, 32
  %v1192 = vpop.permute.xlu0 %1191
  %1193 = vrot.lane.b32.xlu0 %v1190, 32
  %v1194 = vpop.permute.xlu0 %1193
  %v1195 = vrot.slane %v1192, 4
  %v1196 = vrot.slane %v1194, 4
  %vm1197 = vcmask 261120
  %v1198 = vsel %vm1197, %v1195, %v1192
  %v1199 = vsel %vm1197, %v1196, %v1194
  %vm1202 = vcmask 1043712
  %vm1203 = vcmask 392196
  %vm1204 = vmor %vm1203, %vm1202
  %1205 = vst.msk [vmem:[#allocation4 + $0x8] sm:$0xff] %vm1204, %v1198
  %1206 = vst.msk [vmem:[#allocation4 + $0x18] sm:$0xff] %vm1204, %v1199
  %v1207 = vld [vmem:[#allocation3 + $0x10] sm:$0xee]
  %v1208 = vld [vmem:[#allocation3 + $0x18] sm:$0xff]
  %v1209 = vld [vmem:[#allocation3 + $0x20] sm:$0x11]
  %v1213 = vrot.slane %v1207, 5
  %v1214 = vrot.slane %v1213, 4
  %v1215 = vrot.slane %v1208, 5
  %v1216 = vsel %vm86, %v1214, %v1215
  %v1217 = vrot.slane %v1215, 4
  %v1218 = vrot.slane %v1209, 5
  %v1219 = vsel %vm86, %v1217, %v1218
  %1222 = vst.msk [vmem:[#allocation4 + $0x20] sm:$0xff] %vm994, %v1216
  %1223 = vst.msk [vmem:[#allocation4 + $0x30] sm:$0xff] %vm994, %v1219
  %v1224 = vld [vmem:[#allocation3 + $0x10] sm:$0xee]
  %v1225 = vld [vmem:[#allocation3 + $0x18] sm:$0xff]
  %v1226 = vld [vmem:[#allocation3 + $0x20] sm:$0x33]
  %v1228 = vshrl.u32 %v1224, 16
  %v1230 = vrot.slane %v1228, 5
  %v1231 = vshll.u32 %v1224, 16
  %v1233 = vrot.slane %v1231, 6
  %v1234 = vor.u32 %v1230, %v1233
  %v1235 = vrot.slane %v1234, 4
  %v1237 = vshrl.u32 %v1225, 16
  %v1239 = vrot.slane %v1237, 5
  %v1240 = vshll.u32 %v1225, 16
  %v1242 = vrot.slane %v1240, 6
  %v1243 = vor.u32 %v1239, %v1242
  %v1244 = vsel %vm125, %v1235, %v1243
  %v1245 = vrot.slane %v1243, 4
  %v1247 = vshrl.u32 %v1226, 16
  %v1249 = vrot.slane %v1247, 5
  %v1250 = vshll.u32 %v1226, 16
  %v1252 = vrot.slane %v1250, 6
  %v1253 = vor.u32 %v1249, %v1252
  %v1254 = vsel %vm125, %v1245, %v1253
  %1255 = vrot.lane.b32.xlu0 %v1244, 16
  %v1256 = vpop.permute.xlu0 %1255
  %1257 = vrot.lane.b32.xlu0 %v1254, 16
  %v1258 = vpop.permute.xlu0 %1257
  %v1259 = vrot.slane %v1256, 4
  %v1260 = vrot.slane %v1258, 4
  %v1261 = vsel %vm1168, %v1259, %v1256
  %v1262 = vsel %vm1168, %v1260, %v1258
  %1265 = vst.msk [vmem:[#allocation4 + $0x24] sm:$0xff] %vm1175, %v1261
  %1266 = vst.msk [vmem:[#allocation4 + $0x34] sm:$0xff] %vm1175, %v1262
  %v1267 = vld [vmem:[#allocation3 + $0x10] sm:$0xcc]
  %v1268 = vld [vmem:[#allocation3 + $0x18] sm:$0xff]
  %v1269 = vld [vmem:[#allocation3 + $0x20] sm:$0x33]
  %v1273 = vrot.slane %v1267, 6
  %v1274 = vrot.slane %v1273, 4
  %v1275 = vrot.slane %v1268, 6
  %v1276 = vsel %vm174, %v1274, %v1275
  %v1277 = vrot.slane %v1275, 4
  %v1278 = vrot.slane %v1269, 6
  %v1279 = vsel %vm174, %v1277, %v1278
  %1280 = vrot.lane.b32.xlu0 %v1276, 32
  %v1281 = vpop.permute.xlu0 %1280
  %1282 = vrot.lane.b32.xlu0 %v1279, 32
  %v1283 = vpop.permute.xlu0 %1282
  %v1284 = vrot.slane %v1281, 4
  %v1285 = vrot.slane %v1283, 4
  %v1286 = vsel %vm1197, %v1284, %v1281
  %v1287 = vsel %vm1197, %v1285, %v1283
  %1290 = vst.msk [vmem:[#allocation4 + $0x28] sm:$0xff] %vm1204, %v1286
  %1291 = vst.msk [vmem:[#allocation4 + $0x38] sm:$0xff] %vm1204, %v1287
  %v1292 = vld [vmem:[#allocation4] sm:$0xff]
  %v1293 = vld [vmem:[#allocation4 + $0x8] sm:$0xff]
  %v1294 = vld [vmem:[#allocation4 + $0x10] sm:$0xff]
  %v1295 = vld [vmem:[#allocation4 + $0x18] sm:$0xff]
  %v1296 = vld [vmem:[#allocation4 + $0x20] sm:$0xff]
  %v1297 = vld [vmem:[#allocation4 + $0x28] sm:$0xff]
  %v1298 = vld [vmem:[#allocation4 + $0x30] sm:$0xff]
  %v1299 = vld [vmem:[#allocation4 + $0x38] sm:$0xff]
  %v1300 = vld [vmem:[%s2] sm:$0xf]
  %v1301 = vld [vmem:[%s2 + $0x4] sm:$0xf]
  %v1302 = vld [vmem:[%s2 + $0x8] sm:$0xf]
  %v1303 = vld [vmem:[%s2 + $0xc] sm:$0xf]
  %v1304 = vld [vmem:[%s2 + $0x10] sm:$0xf]
  %v1305 = vld [vmem:[%s2 + $0x14] sm:$0xf]
  %v1306 = vld [vmem:[%s2 + $0x18] sm:$0xf]
  %v1307 = vld [vmem:[%s2 + $0x1c] sm:$0xf]
  %v1308 = vld [vmem:[%s2 + $0x20] sm:$0xf]
  %v1309 = vld [vmem:[%s2 + $0x24] sm:$0xf]
  %v1310 = vld [vmem:[%s2 + $0x28] sm:$0xf]
  %v1311 = vld [vmem:[%s2 + $0x2c] sm:$0xf]
  %v1312 = vld [vmem:[%s2 + $0x30] sm:$0xf]
  %v1313 = vld [vmem:[%s2 + $0x34] sm:$0xf]
  %v1314 = vld [vmem:[%s2 + $0x38] sm:$0xf]
  %v1315 = vld [vmem:[%s2 + $0x3c] sm:$0xf]
  %v1316 = vld [vmem:[%s2 + $0x40] sm:$0xf]
  %v1317 = vld [vmem:[%s2 + $0x44] sm:$0xf]
  %v1318 = vld [vmem:[%s2 + $0x48] sm:$0xf]
  %v1319 = vld [vmem:[%s2 + $0x4c] sm:$0xf]
  %v1320 = vld [vmem:[%s2 + $0x50] sm:$0xf]
  %v1321 = vld [vmem:[%s2 + $0x54] sm:$0xf]
  %v1322 = vld [vmem:[%s2 + $0x58] sm:$0xf]
  %v1323 = vld [vmem:[%s2 + $0x5c] sm:$0xf]
  %v1324 = vld [vmem:[%s2 + $0x60] sm:$0xf]
  %v1325 = vld [vmem:[%s2 + $0x64] sm:$0xf]
  %v1326 = vld [vmem:[%s2 + $0x68] sm:$0xf]
  %v1327 = vld [vmem:[%s2 + $0x6c] sm:$0xf]
  %v1328 = vld [vmem:[%s2 + $0x70] sm:$0xf]
  %v1329 = vld [vmem:[%s2 + $0x74] sm:$0xf]
  %v1330 = vld [vmem:[%s2 + $0x78] sm:$0xf]
  %v1331 = vld [vmem:[%s2 + $0x7c] sm:$0xf]
  %v1332 = vld [vmem:[%s2 + $0x80] sm:$0xf]
  %v1333 = vld [vmem:[%s2 + $0x84] sm:$0xf]
  %v1334 = vld [vmem:[%s2 + $0x88] sm:$0xf]
  %v1335 = vld [vmem:[%s2 + $0x8c] sm:$0xf]
  %v1336 = vld [vmem:[%s2 + $0x90] sm:$0xf]
  %v1337 = vld [vmem:[%s2 + $0x94] sm:$0xf]
  %v1338 = vld [vmem:[%s2 + $0x98] sm:$0xf]
  %v1339 = vld [vmem:[%s2 + $0x9c] sm:$0xf]
  %v1340 = vld [vmem:[%s2 + $0xa0] sm:$0xf]
  %v1341 = vld [vmem:[%s2 + $0xa4] sm:$0xf]
  %v1342 = vld [vmem:[%s2 + $0xa8] sm:$0xf]
  %v1343 = vld [vmem:[%s2 + $0xac] sm:$0xf]
  %v1344 = vld [vmem:[%s2 + $0xb0] sm:$0xf]
  %v1345 = vld [vmem:[%s2 + $0xb4] sm:$0xf]
  %v1346 = vld [vmem:[%s2 + $0xb8] sm:$0xf]
  %v1347 = vld [vmem:[%s2 + $0xbc] sm:$0xf]
  %v1348 = vld [vmem:[%s2 + $0xc0] sm:$0xf]
  %v1349 = vld [vmem:[%s2 + $0xc4] sm:$0xf]
  %v1350 = vld [vmem:[%s2 + $0xc8] sm:$0xf]
  %v1351 = vld [vmem:[%s2 + $0xcc] sm:$0xf]
  %v1352 = vld [vmem:[%s2 + $0xd0] sm:$0xf]
  %v1353 = vld [vmem:[%s2 + $0xd4] sm:$0xf]
  %v1362 = vunpack.c.l.b16 %v1292
  %v1363 = vunpack.c.h.b16 %v1292
  %v1364 = vunpack.c.l.b16 %v1293
  %v1365 = vunpack.c.h.b16 %v1293
  %v1366 = vunpack.c.l.b16 %v1294
  %v1367 = vunpack.c.h.b16 %v1294
  %v1368 = vunpack.c.l.b16 %v1295
  %v1369 = vunpack.c.h.b16 %v1295
  %v1370 = vunpack.c.l.b16 %v1296
  %v1371 = vunpack.c.h.b16 %v1296
  %v1372 = vunpack.c.l.b16 %v1297
  %v1373 = vunpack.c.h.b16 %v1297
  %v1374 = vunpack.c.l.b16 %v1298
  %v1375 = vunpack.c.h.b16 %v1298
  %v1376 = vunpack.c.l.b16 %v1299
  %v1377 = vunpack.c.h.b16 %v1299
  %v1378 = vpack.c.b16 %v1366, %v1362
  %v1379 = vpack.c.b16 %v1367, %v1363
  %v1380 = vpack.c.b16 %v1368, %v1364
  %v1381 = vpack.c.b16 %v1369, %v1365
  %v1382 = vpack.c.b16 %v1374, %v1370
  %v1383 = vpack.c.b16 %v1375, %v1371
  %v1384 = vpack.c.b16 %v1376, %v1372
  %v1385 = vpack.c.b16 %v1377, %v1373
  %v1446 = vunpack.c.l.b16 %v1300
  %v1447 = vunpack.c.l.b16 %v1301
  %v1448 = vunpack.c.l.b16 %v1302
  %v1449 = vunpack.c.l.b16 %v1303
  %v1450 = vunpack.c.l.b16 %v1304
  %v1451 = vunpack.c.l.b16 %v1305
  %v1452 = vunpack.c.l.b16 %v1306
  %v1453 = vunpack.c.l.b16 %v1307
  %v1454 = vunpack.c.l.b16 %v1308
  %v1455 = vunpack.c.l.b16 %v1309
  %v1456 = vunpack.c.l.b16 %v1310
  %v1457 = vunpack.c.l.b16 %v1311
  %v1458 = vunpack.c.l.b16 %v1312
  %v1459 = vunpack.c.l.b16 %v1313
  %v1460 = vunpack.c.l.b16 %v1314
  %v1461 = vunpack.c.l.b16 %v1315
  %v1462 = vunpack.c.l.b16 %v1316
  %v1463 = vunpack.c.l.b16 %v1317
  %v1464 = vunpack.c.l.b16 %v1318
  %v1465 = vunpack.c.l.b16 %v1319
  %v1466 = vunpack.c.l.b16 %v1320
  %v1467 = vunpack.c.l.b16 %v1321
  %v1468 = vunpack.c.l.b16 %v1322
  %v1469 = vunpack.c.l.b16 %v1323
  %v1470 = vunpack.c.l.b16 %v1324
  %v1471 = vunpack.c.l.b16 %v1325
  %v1472 = vunpack.c.l.b16 %v1326
  %v1473 = vunpack.c.l.b16 %v1327
  %v1474 = vunpack.c.l.b16 %v1328
  %v1475 = vunpack.c.l.b16 %v1329
  %v1476 = vunpack.c.l.b16 %v1330
  %v1477 = vunpack.c.l.b16 %v1331
  %v1478 = vunpack.c.l.b16 %v1332
  %v1479 = vunpack.c.l.b16 %v1333
  %v1480 = vunpack.c.l.b16 %v1334
  %v1481 = vunpack.c.l.b16 %v1335
  %v1482 = vunpack.c.l.b16 %v1336
  %v1483 = vunpack.c.l.b16 %v1337
  %v1484 = vunpack.c.l.b16 %v1338
  %v1485 = vunpack.c.l.b16 %v1339
  %v1486 = vunpack.c.l.b16 %v1340
  %v1487 = vunpack.c.l.b16 %v1341
  %v1488 = vunpack.c.l.b16 %v1342
  %v1489 = vunpack.c.l.b16 %v1343
  %v1490 = vunpack.c.l.b16 %v1344
  %v1491 = vunpack.c.l.b16 %v1345
  %v1492 = vunpack.c.l.b16 %v1346
  %v1493 = vunpack.c.l.b16 %v1347
  %v1494 = vunpack.c.l.b16 %v1348
  %v1495 = vunpack.c.l.b16 %v1349
  %v1496 = vunpack.c.l.b16 %v1350
  %v1497 = vunpack.c.l.b16 %v1351
  %v1498 = vunpack.c.l.b16 %v1352
  %v1499 = vunpack.c.l.b16 %v1353
  %v1500 = vpack.c.b16 %v1447, %v1446
  %v1501 = vpack.c.b16 %v1449, %v1448
  %v1502 = vpack.c.b16 %v1451, %v1450
  %v1503 = vpack.c.b16 %v1453, %v1452
  %v1504 = vpack.c.b16 %v1455, %v1454
  %v1505 = vpack.c.b16 %v1457, %v1456
  %v1506 = vpack.c.b16 %v1459, %v1458
  %v1507 = vpack.c.b16 %v1461, %v1460
  %v1508 = vpack.c.b16 %v1463, %v1462
  %v1509 = vpack.c.b16 %v1465, %v1464
  %v1510 = vpack.c.b16 %v1467, %v1466
  %v1511 = vpack.c.b16 %v1469, %v1468
  %v1512 = vpack.c.b16 %v1471, %v1470
  %v1513 = vpack.c.b16 %v1473, %v1472
  %v1514 = vpack.c.b16 %v1475, %v1474
  %v1515 = vpack.c.b16 %v1477, %v1476
  %v1516 = vpack.c.b16 %v1479, %v1478
  %v1517 = vpack.c.b16 %v1481, %v1480
  %v1518 = vpack.c.b16 %v1483, %v1482
  %v1519 = vpack.c.b16 %v1485, %v1484
  %v1520 = vpack.c.b16 %v1487, %v1486
  %v1521 = vpack.c.b16 %v1489, %v1488
  %v1522 = vpack.c.b16 %v1491, %v1490
  %v1523 = vpack.c.b16 %v1493, %v1492
  %v1524 = vpack.c.b16 %v1495, %v1494
  %v1525 = vpack.c.b16 %v1497, %v1496
  %v1526 = vpack.c.b16 %v1499, %v1498
  %vm1554 = vcmask 392192
  %v1556 = vsel %vm1554, %v1381, 0
  %v1559 = vsel %vm1554, %v1385, 0
  %1561 = vmatprep.subr.bf16.mxu0 0
  %1562 = vmatpush1.bf16.msra.mxu0 %v1507
  %1563 = vmatprep.subr.bf16.mxu0 0
  %1564 = vmatpush1.bf16.msra.mxu0 %v1506
  %1565 = vmatprep.subr.bf16.mxu0 0
  %1566 = vmatpush1.bf16.msra.mxu0 %v1505
  %1567 = vmatprep.subr.bf16.mxu0 0
  %1568 = vmatpush1.bf16.msra.mxu0 %v1504
  %1569 = vmatprep.subr.bf16.mxu0 0
  %1570 = vmatpush1.bf16.msra.mxu0 %v1503
  %1571 = vmatprep.subr.bf16.mxu0 0
  %1572 = vmatpush1.bf16.msra.mxu0 %v1502
  %1573 = vmatprep.subr.bf16.mxu0 0
  %1574 = vmatpush1.bf16.msra.mxu0 %v1501
  %1575 = vmatprep.subr.bf16.mxu0 0
  %1576 = vmatpush1.bf16.msra.mxu0 %v1500
  %1577 = vmatprep.subr.bf16.mxu0 0
  %1578 = vmatpush2.bf16.msra.mxu0 %v1515
  %1579 = vmatprep.subr.bf16.mxu0 0
  %1580 = vmatpush2.bf16.msra.mxu0 %v1514
  %1581 = vmatprep.subr.bf16.mxu0 0
  %1582 = vmatpush2.bf16.msra.mxu0 %v1513
  %1583 = vmatprep.subr.bf16.mxu0 0
  %1584 = vmatpush2.bf16.msra.mxu0 %v1512
  %1585 = vmatprep.subr.bf16.mxu0 0
  %1586 = vmatpush2.bf16.msra.mxu0 %v1511
  %1587 = vmatprep.subr.bf16.mxu0 0
  %1588 = vmatpush2.bf16.msra.mxu0 %v1510
  %1589 = vmatprep.subr.bf16.mxu0 0
  %1590 = vmatpush2.bf16.msra.mxu0 %v1509
  %1591 = vmatprep.subr.bf16.mxu0 0
  %1592 = vmatpush2.bf16.msra.mxu0 %v1508
  %1593 = vmatprep.mubr.bf16.mxu0 %v1379
  %1594 = vmatmul.mubr.bf16.gmra.mxu0 %v1378
  %v1595 = vpop.f32.mrf.mxu0
  %v1596 = vadd.f32 0.0, %v1595
  %v1597 = vpop.f32.mrf.mxu0
  %v1598 = vpop.f32.mrf.mxu0
  %v1599 = vadd.f32 0.0, %v1598
  %v1600 = vpop.f32.mrf.mxu0
  %1601 = vmatprep.mubr.bf16.mxu0 %v1383
  %1602 = vmatmul.mubr.bf16.gmra.mxu0 %v1382
  %v1603 = vpop.f32.mrf.mxu0
  %v1604 = vadd.f32 0.0, %v1603
  %v1605 = vpop.f32.mrf.mxu0
  %v1606 = vpop.f32.mrf.mxu0
  %v1607 = vadd.f32 0.0, %v1606
  %v1608 = vpop.f32.mrf.mxu0
  %1609 = vdwg.mxu0
  %1610 = vmatprep.subr.bf16.mxu0 0
  %1611 = vmatpush1.bf16.msra.mxu0 %v1523
  %1612 = vmatprep.subr.bf16.mxu0 0
  %1613 = vmatpush1.bf16.msra.mxu0 %v1522
  %1614 = vmatprep.subr.bf16.mxu0 0
  %1615 = vmatpush1.bf16.msra.mxu0 %v1521
  %1616 = vmatprep.subr.bf16.mxu0 0
  %1617 = vmatpush1.bf16.msra.mxu0 %v1520
  %1618 = vmatprep.subr.bf16.mxu0 0
  %1619 = vmatpush1.bf16.msra.mxu0 %v1519
  %1620 = vmatprep.subr.bf16.mxu0 0
  %1621 = vmatpush1.bf16.msra.mxu0 %v1518
  %1622 = vmatprep.subr.bf16.mxu0 0
  %1623 = vmatpush1.bf16.msra.mxu0 %v1517
  %1624 = vmatprep.subr.bf16.mxu0 0
  %1625 = vmatpush1.bf16.msra.mxu0 %v1516
  %1626 = vmatprep.subr.bf16.mxu0 0
  %1627 = vmatpush2.bf16.msra.mxu0 0
  %1628 = vmatprep.subr.bf16.mxu0 0
  %1629 = vmatpush2.bf16.msra.mxu0 0
  %1630 = vmatprep.subr.bf16.mxu0 0
  %1631 = vmatpush2.bf16.msra.mxu0 0
  %1632 = vmatprep.subr.bf16.mxu0 0
  %1633 = vmatpush2.bf16.msra.mxu0 0
  %1634 = vmatprep.subr.bf16.mxu0 0
  %1635 = vmatpush2.bf16.msra.mxu0 0
  %1636 = vmatprep.subr.bf16.mxu0 0
  %1637 = vmatpush2.bf16.msra.mxu0 %v1526
  %1638 = vmatprep.subr.bf16.mxu0 0
  %1639 = vmatpush2.bf16.msra.mxu0 %v1525
  %1640 = vmatprep.subr.bf16.mxu0 0
  %1641 = vmatpush2.bf16.msra.mxu0 %v1524
  %1642 = vmatprep.mubr.bf16.mxu0 %v1556
  %1643 = vmatmul.mubr.bf16.gmra.mxu0 %v1380
  %v1644 = vpop.f32.mrf.mxu0
  %v1645 = vadd.f32 %v1596, %v1644
  %v1646 = vpop.f32.mrf.mxu0
  %v1647 = vpop.f32.mrf.mxu0
  %v1648 = vadd.f32 %v1599, %v1647
  %v1649 = vpop.f32.mrf.mxu0
  %1650 = vmatprep.mubr.bf16.mxu0 %v1559
  %1651 = vmatmul.mubr.bf16.gmra.mxu0 %v1384
  %v1652 = vpop.f32.mrf.mxu0
  %v1653 = vadd.f32 %v1604, %v1652
  %v1654 = vpop.f32.mrf.mxu0
  %v1655 = vpop.f32.mrf.mxu0
  %v1656 = vadd.f32 %v1607, %v1655
  %v1657 = vpop.f32.mrf.mxu0
  %1658 = vdwg.mxu0
  %v1659 = vadd.f32 %v1645, %v1648
  %v1660 = vadd.f32 %v1659, %v1653
  %v1661 = vadd.f32 %v1660, %v1656
  %v1662 = vrot.slane %v1661, 4
  %v1663 = vadd.f32 %v1661, %v1662
  %v1664 = vrot.slane %v1663, 2
  %v1665 = vadd.f32 %v1663, %v1664
  %v1666 = vrot.slane %v1665, 1
  %v1667 = vadd.f32 %v1665, %v1666
  %1668 = vmatprep.subr.mxu0 0.0
  %1669 = vmatpush1.msra.mxu0 %v638
  %1670 = vmatprep.subr.mxu0 0.0
  %1671 = vmatpush1.msra.mxu0 %v637
  %1672 = vmatprep.subr.mxu0 0.0
  %1673 = vmatpush1.msra.mxu0 %v636
  %1674 = vmatprep.subr.mxu0 0.0
  %1675 = vmatpush1.msra.mxu0 %v635
  %1676 = vmatprep.subr.mxu0 0.0
  %1677 = vmatpush1.msra.mxu0 %v634
  %1678 = vmatprep.subr.mxu0 0.0
  %1679 = vmatpush1.msra.mxu0 %v633
  %1680 = vmatprep.subr.mxu0 0.0
  %1681 = vmatpush1.msra.mxu0 %v632
  %1682 = vmatprep.subr.mxu0 0.0
  %1683 = vmatpush1.msra.mxu0 %v631
  %1684 = vmatprep.subr.mxu0 0.0
  %1685 = vmatpush1.msra.mxu0 %v630
  %1686 = vmatprep.subr.mxu0 0.0
  %1687 = vmatpush1.msra.mxu0 %v629
  %1688 = vmatprep.subr.mxu0 0.0
  %1689 = vmatpush1.msra.mxu0 %v628
  %1690 = vmatprep.subr.mxu0 0.0
  %1691 = vmatpush1.msra.mxu0 %v627
  %1692 = vmatprep.subr.mxu0 0.0
  %1693 = vmatpush1.msra.mxu0 %v626
  %1694 = vmatprep.subr.mxu0 0.0
  %1695 = vmatpush1.msra.mxu0 %v625
  %1696 = vmatprep.subr.mxu0 0.0
  %1697 = vmatpush1.msra.mxu0 %v624
  %1698 = vmatprep.subr.mxu0 0.0
  %1699 = vmatpush1.msra.mxu0 %v623
  %1700 = vmatprep.subr.mxu0 0.0
  %1701 = vmatpush2.msra.mxu0 0.0
  %1702 = vmatprep.subr.mxu0 0.0
  %1703 = vmatpush2.msra.mxu0 0.0
  %1704 = vmatprep.subr.mxu0 0.0
  %1705 = vmatpush2.msra.mxu0 0.0
  %1706 = vmatprep.subr.mxu0 0.0
  %1707 = vmatpush2.msra.mxu0 0.0
  %1708 = vmatprep.subr.mxu0 0.0
  %1709 = vmatpush2.msra.mxu0 0.0
  %1710 = vmatprep.subr.mxu0 0.0
  %1711 = vmatpush2.msra.mxu0 0.0
  %1712 = vmatprep.subr.mxu0 0.0
  %1713 = vmatpush2.msra.mxu0 0.0
  %1714 = vmatprep.subr.mxu0 0.0
  %1715 = vmatpush2.msra.mxu0 0.0
  %1716 = vmatprep.subr.mxu0 0.0
  %1717 = vmatpush2.msra.mxu0 0.0
  %1718 = vmatprep.subr.mxu0 0.0
  %1719 = vmatpush2.msra.mxu0 0.0
  %1720 = vmatprep.subr.mxu0 0.0
  %1721 = vmatpush2.msra.mxu0 0.0
  %1722 = vmatprep.subr.mxu0 0.0
  %1723 = vmatpush2.msra.mxu0 0.0
  %1724 = vmatprep.subr.mxu0 0.0
  %1725 = vmatpush2.msra.mxu0 0.0
  %1726 = vmatprep.subr.mxu0 0.0
  %1727 = vmatpush2.msra.mxu0 0.0
  %1728 = vmatprep.subr.mxu0 0.0
  %1729 = vmatpush2.msra.mxu0 0.0
  %1730 = vmatprep.subr.mxu0 0.0
  %1731 = vmatpush2.msra.mxu0 0.0
  %1732 = vmatprep.mubr.f32.mxu0 0.0
  %1733 = vmatmul.mubr.f32.gmra.mxu0 %v1667
  %v1734 = vpop.f32.mrf.mxu0
  %v1735 = vadd.f32 0.0, %v1734
  %v1736 = vpop.f32.mrf.mxu0
  %1737 = vdwg.mxu0
  %v1738 = vmul.f32 %v1645, %v1645
  %v1739 = vmul.f32 %v1648, %v1648
  %v1740 = vmul.f32 %v1653, %v1653
  %v1741 = vmul.f32 %v1656, %v1656
  %v1742 = vadd.f32 %v1738, %v1739
  %v1743 = vadd.f32 %v1742, %v1740
  %v1744 = vadd.f32 %v1743, %v1741
  %v1745 = vrot.slane %v1744, 4
  %v1746 = vadd.f32 %v1744, %v1745
  %v1747 = vrot.slane %v1746, 2
  %v1748 = vadd.f32 %v1746, %v1747
  %v1749 = vrot.slane %v1748, 1
  %v1750 = vadd.f32 %v1748, %v1749
  %1751 = vmatprep.subr.mxu0 0.0
  %1752 = vmatpush1.msra.mxu0 %v638
  %1753 = vmatprep.subr.mxu0 0.0
  %1754 = vmatpush1.msra.mxu0 %v637
  %1755 = vmatprep.subr.mxu0 0.0
  %1756 = vmatpush1.msra.mxu0 %v636
  %1757 = vmatprep.subr.mxu0 0.0
  %1758 = vmatpush1.msra.mxu0 %v635
  %1759 = vmatprep.subr.mxu0 0.0
  %1760 = vmatpush1.msra.mxu0 %v634
  %1761 = vmatprep.subr.mxu0 0.0
  %1762 = vmatpush1.msra.mxu0 %v633
  %1763 = vmatprep.subr.mxu0 0.0
  %1764 = vmatpush1.msra.mxu0 %v632
  %1765 = vmatprep.subr.mxu0 0.0
  %1766 = vmatpush1.msra.mxu0 %v631
  %1767 = vmatprep.subr.mxu0 0.0
  %1768 = vmatpush1.msra.mxu0 %v630
  %1769 = vmatprep.subr.mxu0 0.0
  %1770 = vmatpush1.msra.mxu0 %v629
  %1771 = vmatprep.subr.mxu0 0.0
  %1772 = vmatpush1.msra.mxu0 %v628
  %1773 = vmatprep.subr.mxu0 0.0
  %1774 = vmatpush1.msra.mxu0 %v627
  %1775 = vmatprep.subr.mxu0 0.0
  %1776 = vmatpush1.msra.mxu0 %v626
  %1777 = vmatprep.subr.mxu0 0.0
  %1778 = vmatpush1.msra.mxu0 %v625
  %1779 = vmatprep.subr.mxu0 0.0
  %1780 = vmatpush1.msra.mxu0 %v624
  %1781 = vmatprep.subr.mxu0 0.0
  %1782 = vmatpush1.msra.mxu0 %v623
  %1783 = vmatprep.subr.mxu0 0.0
  %1784 = vmatpush2.msra.mxu0 0.0
  %1785 = vmatprep.subr.mxu0 0.0
  %1786 = vmatpush2.msra.mxu0 0.0
  %1787 = vmatprep.subr.mxu0 0.0
  %1788 = vmatpush2.msra.mxu0 0.0
  %1789 = vmatprep.subr.mxu0 0.0
  %1790 = vmatpush2.msra.mxu0 0.0
  %1791 = vmatprep.subr.mxu0 0.0
  %1792 = vmatpush2.msra.mxu0 0.0
  %1793 = vmatprep.subr.mxu0 0.0
  %1794 = vmatpush2.msra.mxu0 0.0
  %1795 = vmatprep.subr.mxu0 0.0
  %1796 = vmatpush2.msra.mxu0 0.0
  %1797 = vmatprep.subr.mxu0 0.0
  %1798 = vmatpush2.msra.mxu0 0.0
  %1799 = vmatprep.subr.mxu0 0.0
  %1800 = vmatpush2.msra.mxu0 0.0
  %1801 = vmatprep.subr.mxu0 0.0
  %1802 = vmatpush2.msra.mxu0 0.0
  %1803 = vmatprep.subr.mxu0 0.0
  %1804 = vmatpush2.msra.mxu0 0.0
  %1805 = vmatprep.subr.mxu0 0.0
  %1806 = vmatpush2.msra.mxu0 0.0
  %1807 = vmatprep.subr.mxu0 0.0
  %1808 = vmatpush2.msra.mxu0 0.0
  %1809 = vmatprep.subr.mxu0 0.0
  %1810 = vmatpush2.msra.mxu0 0.0
  %1811 = vmatprep.subr.mxu0 0.0
  %1812 = vmatpush2.msra.mxu0 0.0
  %1813 = vmatprep.subr.mxu0 0.0
  %1814 = vmatpush2.msra.mxu0 0.0
  %1815 = vmatprep.mubr.f32.mxu0 0.0
  %1816 = vmatmul.mubr.f32.gmra.mxu0 %v1750
  %v1817 = vpop.f32.mrf.mxu0
  %v1818 = vadd.f32 0.0, %v1817
  %v1819 = vpop.f32.mrf.mxu0
  %1820 = vdwg.mxu0
  %v1821 = vmul.f32 %v1735, 0.001953125
  %v1822 = vmul.f32 %v1818, 0.001953125
  %v1823 = vmul.f32 %v1821, %v1821
  %v1824 = vsub.f32 %v1822, %v1823
  %v1825 = vld [vmem:[%s5] sm:$0x1]
  %v1826 = vadd.f32 %v1824, 1e-05
  %v1827 = vrsqrt.pop %v1826
  %v1828 = vmul.f32 %v1825, %v1827
  %v1829 = vld [vmem:[%s6] sm:$0x1]
  %v1830 = vmul.f32 %v1821, %v1828
  %v1831 = vsub.f32 %v1829, %v1830
  %v1833 = vsel %vm827, %v1828, 0
  %1835 = vmatprep.subr.mxu0 0.0
  %1836 = vmatpush1.msra.mxu0 0.0
  %1837 = vmatprep.subr.mxu0 0.0
  %1838 = vmatpush1.msra.mxu0 0.0
  %1839 = vmatprep.subr.mxu0 0.0
  %1840 = vmatpush1.msra.mxu0 0.0
  %1841 = vmatprep.subr.mxu0 0.0
  %1842 = vmatpush1.msra.mxu0 0.0
  %1843 = vmatprep.subr.mxu0 0.0
  %1844 = vmatpush1.msra.mxu0 0.0
  %1845 = vmatprep.subr.mxu0 0.0
  %1846 = vmatpush1.msra.mxu0 0.0
  %1847 = vmatprep.subr.mxu0 0.0
  %1848 = vmatpush1.msra.mxu0 0.0
  %1849 = vmatprep.subr.mxu0 0.0
  %1850 = vmatpush1.msra.mxu0 0.0
  %1851 = vmatprep.subr.mxu0 0.0
  %1852 = vmatpush1.msra.mxu0 0.0
  %1853 = vmatprep.subr.mxu0 0.0
  %1854 = vmatpush1.msra.mxu0 0.0
  %1855 = vmatprep.subr.mxu0 0.0
  %1856 = vmatpush1.msra.mxu0 0.0
  %1857 = vmatprep.subr.mxu0 0.0
  %1858 = vmatpush1.msra.mxu0 0.0
  %1859 = vmatprep.subr.mxu0 0.0
  %1860 = vmatpush1.msra.mxu0 0.0
  %1861 = vmatprep.subr.mxu0 0.0
  %1862 = vmatpush1.msra.mxu0 0.0
  %1863 = vmatprep.subr.mxu0 0.0
  %1864 = vmatpush1.msra.mxu0 0.0
  %1865 = vmatprep.subr.mxu0 0.0
  %1866 = vmatpush1.msra.mxu0 %v653
  %1867 = vmatprep.subr.mxu0 0.0
  %1868 = vmatpush2.msra.mxu0 0.0
  %1869 = vmatprep.subr.mxu0 0.0
  %1870 = vmatpush2.msra.mxu0 0.0
  %1871 = vmatprep.subr.mxu0 0.0
  %1872 = vmatpush2.msra.mxu0 0.0
  %1873 = vmatprep.subr.mxu0 0.0
  %1874 = vmatpush2.msra.mxu0 0.0
  %1875 = vmatprep.subr.mxu0 0.0
  %1876 = vmatpush2.msra.mxu0 0.0
  %1877 = vmatprep.subr.mxu0 0.0
  %1878 = vmatpush2.msra.mxu0 0.0
  %1879 = vmatprep.subr.mxu0 0.0
  %1880 = vmatpush2.msra.mxu0 0.0
  %1881 = vmatprep.subr.mxu0 0.0
  %1882 = vmatpush2.msra.mxu0 0.0
  %1883 = vmatprep.subr.mxu0 0.0
  %1884 = vmatpush2.msra.mxu0 0.0
  %1885 = vmatprep.subr.mxu0 0.0
  %1886 = vmatpush2.msra.mxu0 0.0
  %1887 = vmatprep.subr.mxu0 0.0
  %1888 = vmatpush2.msra.mxu0 0.0
  %1889 = vmatprep.subr.mxu0 0.0
  %1890 = vmatpush2.msra.mxu0 0.0
  %1891 = vmatprep.subr.mxu0 0.0
  %1892 = vmatpush2.msra.mxu0 0.0
  %1893 = vmatprep.subr.mxu0 0.0
  %1894 = vmatpush2.msra.mxu0 0.0
  %1895 = vmatprep.subr.mxu0 0.0
  %1896 = vmatpush2.msra.mxu0 0.0
  %1897 = vmatprep.subr.mxu0 0.0
  %1898 = vmatpush2.msra.mxu0 0.0
  %1899 = vmatprep.mubr.f32.mxu0 0.0
  %1900 = vmatmul.mubr.f32.gmra.mxu0 %v1833
  %v1901 = vpop.f32.mrf.mxu0
  %v1902 = vadd.f32 0.0, %v1901
  %v1903 = vpop.f32.mrf.mxu0
  %1904 = vdwg.mxu0
  %v1906 = vsel %vm827, %v1831, 0
  %1908 = vmatprep.subr.mxu0 0.0
  %1909 = vmatpush1.msra.mxu0 0.0
  %1910 = vmatprep.subr.mxu0 0.0
  %1911 = vmatpush1.msra.mxu0 0.0
  %1912 = vmatprep.subr.mxu0 0.0
  %1913 = vmatpush1.msra.mxu0 0.0
  %1914 = vmatprep.subr.mxu0 0.0
  %1915 = vmatpush1.msra.mxu0 0.0
  %1916 = vmatprep.subr.mxu0 0.0
  %1917 = vmatpush1.msra.mxu0 0.0
  %1918 = vmatprep.subr.mxu0 0.0
  %1919 = vmatpush1.msra.mxu0 0.0
  %1920 = vmatprep.subr.mxu0 0.0
  %1921 = vmatpush1.msra.mxu0 0.0
  %1922 = vmatprep.subr.mxu0 0.0
  %1923 = vmatpush1.msra.mxu0 0.0
  %1924 = vmatprep.subr.mxu0 0.0
  %1925 = vmatpush1.msra.mxu0 0.0
  %1926 = vmatprep.subr.mxu0 0.0
  %1927 = vmatpush1.msra.mxu0 0.0
  %1928 = vmatprep.subr.mxu0 0.0
  %1929 = vmatpush1.msra.mxu0 0.0
  %1930 = vmatprep.subr.mxu0 0.0
  %1931 = vmatpush1.msra.mxu0 0.0
  %1932 = vmatprep.subr.mxu0 0.0
  %1933 = vmatpush1.msra.mxu0 0.0
  %1934 = vmatprep.subr.mxu0 0.0
  %1935 = vmatpush1.msra.mxu0 0.0
  %1936 = vmatprep.subr.mxu0 0.0
  %1937 = vmatpush1.msra.mxu0 0.0
  %1938 = vmatprep.subr.mxu0 0.0
  %1939 = vmatpush1.msra.mxu0 %v653
  %1940 = vmatprep.subr.mxu0 0.0
  %1941 = vmatpush2.msra.mxu0 0.0
  %1942 = vmatprep.subr.mxu0 0.0
  %1943 = vmatpush2.msra.mxu0 0.0
  %1944 = vmatprep.subr.mxu0 0.0
  %1945 = vmatpush2.msra.mxu0 0.0
  %1946 = vmatprep.subr.mxu0 0.0
  %1947 = vmatpush2.msra.mxu0 0.0
  %1948 = vmatprep.subr.mxu0 0.0
  %1949 = vmatpush2.msra.mxu0 0.0
  %1950 = vmatprep.subr.mxu0 0.0
  %1951 = vmatpush2.msra.mxu0 0.0
  %1952 = vmatprep.subr.mxu0 0.0
  %1953 = vmatpush2.msra.mxu0 0.0
  %1954 = vmatprep.subr.mxu0 0.0
  %1955 = vmatpush2.msra.mxu0 0.0
  %1956 = vmatprep.subr.mxu0 0.0
  %1957 = vmatpush2.msra.mxu0 0.0
  %1958 = vmatprep.subr.mxu0 0.0
  %1959 = vmatpush2.msra.mxu0 0.0
  %1960 = vmatprep.subr.mxu0 0.0
  %1961 = vmatpush2.msra.mxu0 0.0
  %1962 = vmatprep.subr.mxu0 0.0
  %1963 = vmatpush2.msra.mxu0 0.0
  %1964 = vmatprep.subr.mxu0 0.0
  %1965 = vmatpush2.msra.mxu0 0.0
  %1966 = vmatprep.subr.mxu0 0.0
  %1967 = vmatpush2.msra.mxu0 0.0
  %1968 = vmatprep.subr.mxu0 0.0
  %1969 = vmatpush2.msra.mxu0 0.0
  %1970 = vmatprep.subr.mxu0 0.0
  %1971 = vmatpush2.msra.mxu0 0.0
  %1972 = vmatprep.mubr.f32.mxu0 0.0
  %1973 = vmatmul.mubr.f32.gmra.mxu0 %v1906
  %v1974 = vpop.f32.mrf.mxu0
  %v1975 = vadd.f32 0.0, %v1974
  %v1976 = vpop.f32.mrf.mxu0
  %1977 = vdwg.mxu0
  %v1978 = vlaneseq
  %v1979 = vshrl.u32 %v1978, 7
  %v1980 = vsub.s32 0, %v1979
  %v1981 = vrot.slane %v1902, %v1980
  %v1982 = vmul.f32 %v1645, %v1981
  %v1983 = vmul.f32 %v1648, %v1981
  %v1984 = vmul.f32 %v1653, %v1981
  %v1985 = vmul.f32 %v1656, %v1981
  %v1986 = vlaneseq
  %v1987 = vshrl.u32 %v1986, 7
  %v1988 = vsub.s32 0, %v1987
  %v1989 = vrot.slane %v1975, %v1988
  %v1990 = vadd.f32 %v1982, %v1989
  %v1991 = vadd.f32 %v1983, %v1989
  %v1992 = vadd.f32 %v1984, %v1989
  %v1993 = vadd.f32 %v1985, %v1989
  %v1994 = vmax.f32 %v1990, 0.0
  %v1995 = vmax.f32 %v1991, 0.0
  %v1996 = vmax.f32 %v1992, 0.0
  %v1997 = vmax.f32 %v1993, 0.0
  %1998 = vst [vmem:[%s7] sm:$0xff] %v1994
  %1999 = vst [vmem:[%s7 + $0x8] sm:$0xff] %v1995
  %2000 = vst [vmem:[%s7 + $0x10] sm:$0xff] %v1996
  %2001 = vst [vmem:[%s7 + $0x18] sm:$0xff] %v1997
  // Predicated region
  $region30: #{up_unpool_forward.1} parent=0 // pred_check
    _
  $region31: #{up_unpool_forward.1} parent=0 // pred_check_branch
    %2003 = sbr.rel (0) target = $region33
  $region32: #{up_unpool_forward.1} parent=0 // pred_region
    _
  $region33: #{up_unpool_forward.1} parent=0 // pred_fallthru
    _
  // Predicated region
  $region34: #{up_unpool_forward.1} parent=0 // pred_check
    _
  $region35: #{up_unpool_forward.1} parent=0 // pred_check_branch
    %2005 = sbr.rel (0) target = $region37
  $region36: #{up_unpool_forward.1} parent=0 // pred_region
    _
  $region37: #{up_unpool_forward.1} parent=0 // pred_fallthru
    _

</llo_original>
